<compile_context>
chip_gen: v5e
topology: v5e:2x2
jax: 0.10.0
libtpu: 0.0.40
codegen_flags: <defaults>
</compile_context>

<pallas_src>
import math

import jax
import jax.numpy as jnp
from jax import lax
from jax.experimental import pallas as pl
from jax.experimental.pallas import tpu as pltpu


RGB_PAD = 8                          # padded channel width of the RGB path
_MM_DTYPE = jnp.bfloat16             # MXU operand dtype (f32 accumulation)
_TILE_BUDGET = 16 * 1024 * 1024      # per-grid-step working-set target (bytes)
_VMEM_LIMIT = 48 * 1024 * 1024       # fits v7x's 64 MiB/TC with headroom


# ----------------------------------------------------------------------------
# Fused StyleBlock / ToRGB kernel (modulated conv + noise + bias + LeakyReLU)
# ----------------------------------------------------------------------------

def _make_modconv_kernel(*, k, wp, demodulate, use_noise,
                         eps=1e-8, neg_slope=0.2, mm_dtype=_MM_DTYPE):
    """Build the fused modulated-conv kernel for a fixed static config.

    Per grid step (b, t) the kernel sees:
      wl_ref    : (1, 1, d_latent)        latent vector w
      sw_ref    : (Cin, d_latent)         to_style weight (pre-scaled)
      sb_ref    : (Cin, 1)                to_style bias
      x_ref     : (1, 1, LT, Cin)         zero-padded tile, spatially flattened
                                          (LT = (TH + 3*pad) * (W + 2*pad))
      cw_ref    : (k*k, Cin, Cout)        conv weight (pre-scaled)
      [wsq_ref] : (Cin, Cout)             sum_k conv_weight^2   (demodulation)
      [noise]   : (1, M, 1), sn (1, 1)    per-pixel noise, scale_noise
      bias_ref  : (1, Cout)
      out_ref   : (1, M, Cout)            M = TH * (W + 2*pad) "extended" rows
    """
    k2 = k * k
    offs = [kh * wp + kw for kh in range(k) for kw in range(k)]

    def kernel(*refs):
        it = iter(refs)
        wl_ref = next(it)
        sw_ref = next(it)
        sb_ref = next(it)
        x_ref = next(it)
        cw_ref = next(it)
        wsq_ref = next(it) if demodulate else None
        if use_noise:
            noise_ref = next(it)
            sn_ref = next(it)
        bias_ref = next(it)
        out_ref = next(it)

        cin = sw_ref.shape[0]
        cout = out_ref.shape[2]
        m = out_ref.shape[1]

        # style vector (column): s[i] = sum_d W_style[i, d] * w[d] + b[i]
        s = jnp.sum(sw_ref[...] * wl_ref[0], axis=1, keepdims=True) + sb_ref[...]

        # modulate / demodulate the *weights* (small) instead of the activations
        w = cw_ref[...] * s[None, :, :]                                # [k2,Cin,Cout]
        if demodulate:
            sig = jnp.sum(wsq_ref[...] * (s * s), axis=0, keepdims=True) + eps
            w = w * lax.rsqrt(sig)[None, :, :]
        w = w.astype(mm_dtype)

        # conv as matmul(s) over shifted flat views of the padded tile.
        if k2 > 1 and cin % 128 == 0:
            # single MXU matmul with K = k2*Cin (lane-aligned tap concat)
            patches = jnp.concatenate(
                [x_ref[0, 0, pl.ds(o, m), :] for o in offs],
                axis=-1).astype(mm_dtype)
            acc = jnp.dot(patches, w.reshape(k2 * cin, cout),
                          preferred_element_type=jnp.float32)
        else:
            acc = jnp.zeros((m, cout), jnp.float32)
            for kt, o in enumerate(offs):
                tap = x_ref[0, 0, pl.ds(o, m), :].astype(mm_dtype)
                acc = acc + jnp.dot(tap, w[kt],
                                    preferred_element_type=jnp.float32)

        if use_noise:
            acc = acc + sn_ref[...] * noise_ref[0]                     # [M,1] bcast
        acc = acc + bias_ref[...]                                      # [1,Cout]
        out_ref[0] = jnp.where(acc >= 0.0, acc, neg_slope * acc)       # LeakyReLU

    return kernel


def _pick_tile_h(H, W, Cin, Cout, k):
    """Largest power-of-two H-tile whose double-buffered working set fits."""
    pad = (k - 1) // 2
    wp = W + 2 * pad

    def step_bytes(th):
        return 8 * ((th + 3 * pad) * wp * Cin + th * wp * (Cout + 1))

    th = H
    while th > 4 and step_bytes(th) > _TILE_BUDGET:
        nxt = th // 2
        if (nxt * wp) % 8 != 0:        # keep output/noise block (8,128)-friendly
            break
        th = nxt
    return th


def _modconv_call(p, x, w_lat, noise, *, demodulate, use_noise):
    """StyleBlock / ToRGB forward.  x: [B,H,W,Cin] (NHWC), w_lat: [B,d_latent]."""
    B, H, W, Cin = x.shape
    k = p['k']
    pad = (k - 1) // 2
    wp = W + 2 * pad
    Cout = p['cw'].shape[2]

    TH = _pick_tile_h(H, W, Cin, Cout, k)
    assert H % TH == 0
    NT = H // TH
    m = TH * wp                       # "extended" output rows per tile
    lt = (TH + 3 * pad) * wp          # padded, flattened tile length

    # zero-pad spatially ((pad, 2*pad) rows so all shifted views stay in-bounds)
    if pad:
        xp = jnp.pad(x, ((0, 0), (pad, 2 * pad), (pad, pad), (0, 0)))
    else:
        xp = x
    if NT == 1:
        xt = xp.reshape(B, 1, lt, Cin)
    else:
        tiles = [xp[:, t * TH:t * TH + TH + 3 * pad].reshape(B, 1, lt, Cin)
                 for t in range(NT)]
        xt = jnp.concatenate(tiles, axis=1)

    wl = w_lat.reshape(B, 1, -1)
    d_latent = wl.shape[-1]

    args = [wl, p['sw'], p['sb'], xt, p['cw']]
    in_specs = [
        pl.BlockSpec((1, 1, d_latent), lambda b, t: (b, 0, 0)),
        pl.BlockSpec((Cin, d_latent), lambda b, t: (0, 0)),
        pl.BlockSpec((Cin, 1), lambda b, t: (0, 0)),
        pl.BlockSpec((1, 1, lt, Cin), lambda b, t: (b, t, 0, 0)),
        pl.BlockSpec((k * k, Cin, Cout), lambda b, t: (0, 0, 0)),
    ]
    if demodulate:
        args.append(p['wsq'])
        in_specs.append(pl.BlockSpec((Cin, Cout), lambda b, t: (0, 0)))
    if use_noise:
        noise_ext = noise
        if pad:
            noise_ext = jnp.pad(noise, ((0, 0), (0, 0), (0, 2 * pad), (0, 0)))
        noise_ext = noise_ext.reshape(B, H * wp, 1)
        args += [noise_ext, p['scale_noise']]
        in_specs += [pl.BlockSpec((1, m, 1), lambda b, t: (b, t, 0)),
                     pl.BlockSpec((1, 1), lambda b, t: (0, 0))]
    args.append(p['bias'])
    in_specs.append(pl.BlockSpec((1, Cout), lambda b, t: (0, 0)))

    kern = _make_modconv_kernel(k=k, wp=wp, demodulate=demodulate,
                                use_noise=use_noise)
    out = pl.pallas_call(
        kern,
        grid=(B, NT),
        in_specs=in_specs,
        out_specs=pl.BlockSpec((1, m, Cout), lambda b, t: (b, t, 0)),
        out_shape=jax.ShapeDtypeStruct((B, H * wp, Cout), jnp.float32),
        compiler_params=pltpu.CompilerParams(
            dimension_semantics=("parallel", "parallel"),
            vmem_limit_bytes=_VMEM_LIMIT),
    )(*args)

    out = out.reshape(B, H, wp, Cout)
    if pad:
        out = out[:, :, :W, :]        # drop the 2 "extended" columns
    return out


# ----------------------------------------------------------------------------
# Fused UpSample (bilinear x2) + Smooth ([1,2,1]/4, replication pad) kernel
# ----------------------------------------------------------------------------
# Composition of the two linear operators along one axis is an exact 3-tap
# stencil on the edge-replicated input:
#   out[2m]   = 0.3125*x[m-1] + 0.6250*x[m] + 0.0625*x[m+1]
#   out[2m+1] = 0.0625*x[m-1] + 0.6250*x[m] + 0.3125*x[m+1]

def upsmooth_kernel(x_ref, even_ref, odd_ref):
    h2 = even_ref.shape[1]            # 2H
    h = h2 // 2
    w = even_ref.shape[2]
    xp = x_ref[0]                     # [H+2, W+2, CT], edge-padded

    # H axis (rows / major dim)
    top, mid, bot = xp[0:h], xp[1:h + 1], xp[2:h + 2]
    he = 0.3125 * top + 0.625 * mid + 0.0625 * bot
    ho = 0.0625 * top + 0.625 * mid + 0.3125 * bot
    t = jnp.stack([he, ho], axis=1).reshape(h2, w + 2, xp.shape[-1])

    # W axis (columns / sublane dim): even columns -> even_ref, odd -> odd_ref
    l, c, r = t[:, 0:w], t[:, 1:w + 1], t[:, 2:w + 2]
    even_ref[0] = 0.3125 * l + 0.625 * c + 0.0625 * r
    odd_ref[0] = 0.0625 * l + 0.625 * c + 0.3125 * r


def upsample_smooth(x):
    """x: [B, H, W, C] -> [B, 2H, 2W, C] (UpSample module of the reference)."""
    B, H, W, C = x.shape
    CT = C if C <= 128 else 128       # channel tile (lane-aligned when tiled)
    # TODO(synk): add halo'd row tiling for very large H*W*CT working sets.
    xp = jnp.pad(x, ((0, 0), (1, 1), (1, 1), (0, 0)), mode='edge')
    even, odd = pl.pallas_call(
        upsmooth_kernel,
        grid=(B, C // CT),
        in_specs=[pl.BlockSpec((1, H + 2, W + 2, CT),
                               lambda b, c: (b, 0, 0, c))],
        out_specs=[pl.BlockSpec((1, 2 * H, W, CT), lambda b, c: (b, 0, 0, c)),
                   pl.BlockSpec((1, 2 * H, W, CT), lambda b, c: (b, 0, 0, c))],
        out_shape=[jax.ShapeDtypeStruct((B, 2 * H, W, C), jnp.float32),
                   jax.ShapeDtypeStruct((B, 2 * H, W, C), jnp.float32)],
        compiler_params=pltpu.CompilerParams(
            dimension_semantics=("parallel", "parallel"),
            vmem_limit_bytes=_VMEM_LIMIT),
    )(xp)
    # interleave even/odd columns (pure layout op, fused by XLA)
    return jnp.stack([even, odd], axis=3).reshape(B, 2 * H, 2 * W, C)


# ----------------------------------------------------------------------------
# Parameter construction (deterministic, follows the module's __init__)
# ----------------------------------------------------------------------------

def _init_modconv(key_style, key_conv, d_latent, in_f, out_f, k, has_noise,
                  out_pad=None):
    sw = jax.random.normal(key_style, (in_f, d_latent), jnp.float32)
    sw = sw * (1.0 / math.sqrt(d_latent))           # EqualizedWeight scale
    sb = jnp.ones((in_f, 1), jnp.float32)           # to_style bias init = 1.0

    wconv = jax.random.normal(key_conv, (out_f, in_f, k, k), jnp.float32)
    ws = wconv * (1.0 / math.sqrt(in_f * k * k))    # EqualizedWeight scale
    cw = jnp.transpose(ws, (2, 3, 1, 0)).reshape(k * k, in_f, out_f)
    wsq = jnp.sum(ws * ws, axis=(2, 3)).T           # [in_f, out_f]
    bias = jnp.zeros((1, out_f), jnp.float32)

    if out_pad is not None and out_pad > out_f:     # lane-friendly RGB padding
        extra = out_pad - out_f
        cw = jnp.pad(cw, ((0, 0), (0, 0), (0, extra)))
        wsq = jnp.pad(wsq, ((0, 0), (0, extra)))
        bias = jnp.pad(bias, ((0, 0), (0, extra)))

    p = dict(sw=sw, sb=sb, cw=cw, wsq=wsq, bias=bias, k=k)
    if has_noise:
        p['scale_noise'] = jnp.zeros((1, 1), jnp.float32)
    return p


def init_generator(key, log_resolution, d_latent, n_features=32,
                   max_features=512):
    features = [min(max_features, n_features * 2 ** i)
                for i in range(log_resolution - 2, -1, -1)]
    n_blocks = len(features)
    keys = iter(jax.random.split(key, 64))
    params = dict(features=features, n_blocks=n_blocks)
    params['initial_constant'] = jax.random.normal(
        next(keys), (1, 4, 4, features[0]), jnp.float32)
    params['style_block'] = _init_modconv(next(keys), next(keys), d_latent,
                                          features[0], features[0], 3, True)
    params['to_rgb'] = _init_modconv(next(keys), next(keys), d_latent,
                                     features[0], 3, 1, False, out_pad=RGB_PAD)
    blocks = []
    for i in range(1, n_blocks):
        blocks.append(dict(
            sb1=_init_modconv(next(keys), next(keys), d_latent,
                              features[i - 1], features[i], 3, True),
            sb2=_init_modconv(next(keys), next(keys), d_latent,
                              features[i], features[i], 3, True),
            to_rgb=_init_modconv(next(keys), next(keys), d_latent,
                                 features[i], 3, 1, False, out_pad=RGB_PAD),
        ))
    params['blocks'] = blocks
    return params


# ----------------------------------------------------------------------------
# Generator forward
# ----------------------------------------------------------------------------

def generator_forward(params, w, input_noise):
    """w: [n_blocks, B, d_latent];
    input_noise: list of n_blocks pairs of NHWC noise [B, res, res, 1]."""
    n_blocks = params['n_blocks']
    B = w.shape[1]
    f0 = params['features'][0]

    # TODO(synk): fuse the tiny 4x4 / 8x8 stages into a single pallas_call to
    # amortise per-call dispatch overhead (they are overhead-dominated).
    x = jnp.broadcast_to(params['initial_constant'], (B, 4, 4, f0))
    x = _modconv_call(params['style_block'], x, w[0], input_noise[0][1],
                      demodulate=True, use_noise=True)
    rgb = _modconv_call(params['to_rgb'], x, w[0], None,
                        demodulate=False, use_noise=False)

    for i in range(1, n_blocks):
        x = upsample_smooth(x)
        blk = params['blocks'][i - 1]
        x = _modconv_call(blk['sb1'], x, w[i], input_noise[i][0],
                          demodulate=True, use_noise=True)
        x = _modconv_call(blk['sb2'], x, w[i], input_noise[i][1],
                          demodulate=True, use_noise=True)
        rgb_new = _modconv_call(blk['to_rgb'], x, w[i], None,
                                demodulate=False, use_noise=False)
        rgb = upsample_smooth(rgb) + rgb_new

    # drop the RGB channel padding once, then back to PyTorch's NCHW convention
    return jnp.transpose(rgb[..., :3], (0, 3, 1, 2))


# ----------------------------------------------------------------------------
# Demo
# ----------------------------------------------------------------------------

if __name__ == "__main__":
    log_resolution = 4        # final resolution 16x16
    d_latent = 32
    n_features = 8
    max_features = 32
    batch = 2

    key = jax.random.PRNGKey(0)
    k_params, k_w, k_noise = jax.random.split(key, 3)

    params = init_generator(k_params, log_resolution, d_latent,
                            n_features, max_features)
    n_blocks = params['n_blocks']

    w = jax.random.normal(k_w, (n_blocks, batch, d_latent), jnp.float32)

    noise_keys = jax.random.split(k_noise, 2 * n_blocks)
    input_noise = []
    for i in range(n_blocks):
        res = 4 * 2 ** i
        n1 = jax.random.normal(noise_keys[2 * i], (batch, res, res, 1),
                               jnp.float32)
        n2 = jax.random.normal(noise_keys[2 * i + 1], (batch, res, res, 1),
                               jnp.float32)
        input_noise.append((n1, n2))

    rgb = generator_forward(params, w, input_noise)
    rgb = jax.block_until_ready(rgb)
    assert rgb.shape == (batch, 3, 2 ** log_resolution, 2 ** log_resolution)
    assert rgb.dtype == jnp.float32
    print("KERNEL_OK")
</pallas_src>

<mosaic_0001>
module attributes {stable_mosaic.version = 11 : i64} {
  func.func @kernel(%arg0: i32, %arg1: i32, %arg2: memref<1x1x32xf32, #tpu.memory_space<vmem>>, %arg3: memref<32x32xf32, #tpu.memory_space<vmem>>, %arg4: memref<32x1xf32, #tpu.memory_space<vmem>>, %arg5: memref<1x1x42x32xf32, #tpu.memory_space<vmem>>, %arg6: memref<9x32x32xf32, #tpu.memory_space<vmem>>, %arg7: memref<32x32xf32, #tpu.memory_space<vmem>>, %arg8: memref<1x24x1xf32, #tpu.memory_space<vmem>>, %arg9: memref<1x1xf32, #tpu.memory_space<vmem>>, %arg10: memref<1x32xf32, #tpu.memory_space<vmem>>, %arg11: memref<1x24x32xf32, #tpu.memory_space<vmem>>) attributes {dimension_semantics = [#tpu.dimension_semantics<parallel>, #tpu.dimension_semantics<parallel>], iteration_bounds = array<i64: 2, 1>, scalar_prefetch = 0 : i64, scratch_operands = 0 : i64, tpu.core_type = #tpu.core_type<tc>, window_params = [{transform_indices = @transform_0, window_bounds = array<i64: 1, 1, 32>}, {pipeline_mode = #tpu.pipeline_mode<synchronous>, transform_indices = @transform_1, window_bounds = array<i64: 32, 32>}, {pipeline_mode = #tpu.pipeline_mode<synchronous>, transform_indices = @transform_2, window_bounds = array<i64: 32, 1>}, {transform_indices = @transform_3, window_bounds = array<i64: 1, 1, 42, 32>}, {pipeline_mode = #tpu.pipeline_mode<synchronous>, transform_indices = @transform_4, window_bounds = array<i64: 9, 32, 32>}, {pipeline_mode = #tpu.pipeline_mode<synchronous>, transform_indices = @transform_5, window_bounds = array<i64: 32, 32>}, {transform_indices = @transform_6, window_bounds = array<i64: 1, 24, 1>}, {pipeline_mode = #tpu.pipeline_mode<synchronous>, transform_indices = @transform_7, window_bounds = array<i64: 1, 1>}, {pipeline_mode = #tpu.pipeline_mode<synchronous>, transform_indices = @transform_8, window_bounds = array<i64: 1, 32>}, {transform_indices = @transform_9, window_bounds = array<i64: 1, 24, 32>}]} {
    %c0 = arith.constant 0 : index
    %c0_0 = arith.constant 0 : index
    %0 = vector.load %arg3[%c0, %c0_0] : memref<32x32xf32, #tpu.memory_space<vmem>>, vector<32x32xf32>
    %c0_1 = arith.constant 0 : index
    %c0_2 = arith.constant 0 : index
    %c0_3 = arith.constant 0 : index
    %1 = vector.load %arg2[%c0_1, %c0_2, %c0_3] : memref<1x1x32xf32, #tpu.memory_space<vmem>>, vector<1x1x32xf32>
    %2 = vector.shape_cast %1 : vector<1x1x32xf32> to vector<1x32xf32>
    %3 = vector.broadcast %2 : vector<1x32xf32> to vector<32x32xf32>
    %4 = arith.mulf %0, %3 : vector<32x32xf32>
    %cst = arith.constant dense<0.000000e+00> : vector<32xf32>
    %5 = vector.multi_reduction <add>, %4, %cst [1] : vector<32x32xf32> to vector<32xf32>
    %6 = vector.shape_cast %5 : vector<32xf32> to vector<32x1xf32>
    %c0_4 = arith.constant 0 : index
    %c0_5 = arith.constant 0 : index
    %7 = vector.load %arg4[%c0_4, %c0_5] : memref<32x1xf32, #tpu.memory_space<vmem>>, vector<32x1xf32>
    %8 = arith.addf %6, %7 : vector<32x1xf32>
    %c0_6 = arith.constant 0 : index
    %c0_7 = arith.constant 0 : index
    %c0_8 = arith.constant 0 : index
    %9 = vector.load %arg6[%c0_6, %c0_7, %c0_8] : memref<9x32x32xf32, #tpu.memory_space<vmem>>, vector<9x32x32xf32>
    %10 = vector.shape_cast %8 : vector<32x1xf32> to vector<1x32x1xf32>
    %11 = vector.broadcast %10 : vector<1x32x1xf32> to vector<9x32x32xf32>
    %12 = arith.mulf %9, %11 : vector<9x32x32xf32>
    %c0_9 = arith.constant 0 : index
    %c0_10 = arith.constant 0 : index
    %13 = vector.load %arg7[%c0_9, %c0_10] : memref<32x32xf32, #tpu.memory_space<vmem>>, vector<32x32xf32>
    %14 = arith.mulf %8, %8 : vector<32x1xf32>
    %15 = vector.broadcast %14 : vector<32x1xf32> to vector<32x32xf32>
    %16 = arith.mulf %13, %15 : vector<32x32xf32>
    %cst_11 = arith.constant dense<0.000000e+00> : vector<32xf32>
    %17 = vector.multi_reduction <add>, %16, %cst_11 [0] : vector<32x32xf32> to vector<32xf32>
    %18 = vector.shape_cast %17 : vector<32xf32> to vector<1x32xf32>
    %cst_12 = arith.constant 9.99999993E-9 : f32
    %19 = vector.broadcast %cst_12 : f32 to vector<1x32xf32>
    %20 = arith.addf %18, %19 : vector<1x32xf32>
    %21 = math.rsqrt %20 : vector<1x32xf32>
    %22 = vector.shape_cast %21 : vector<1x32xf32> to vector<1x1x32xf32>
    %23 = vector.broadcast %22 : vector<1x1x32xf32> to vector<9x32x32xf32>
    %24 = arith.mulf %12, %23 : vector<9x32x32xf32>
    %25 = arith.truncf %24 : vector<9x32x32xf32> to vector<9x32x32xbf16>
    %cst_13 = arith.constant 0.000000e+00 : f32
    %26 = vector.broadcast %cst_13 : f32 to vector<24x32xf32>
    %c0_14 = arith.constant 0 : index
    %c0_15 = arith.constant 0 : index
    %c0_16 = arith.constant 0 : index
    %c0_17 = arith.constant 0 : index
    %27 = vector.load %arg5[%c0_14, %c0_15, %c0_16, %c0_17] : memref<1x1x42x32xf32, #tpu.memory_space<vmem>>, vector<1x1x24x32xf32>
    %28 = vector.shape_cast %27 : vector<1x1x24x32xf32> to vector<24x32xf32>
    %29 = arith.truncf %28 : vector<24x32xf32> to vector<24x32xbf16>
    %30 = vector.extract_strided_slice %25 {offsets = [0, 0, 0], sizes = [1, 32, 32], strides = [1, 1, 1]} : vector<9x32x32xbf16> to vector<1x32x32xbf16>
    %31 = vector.shape_cast %30 : vector<1x32x32xbf16> to vector<32x32xbf16>
    %cst_18 = arith.constant dense<0.000000e+00> : vector<24x32xf32>
    %32 = tpu.matmul %29, %31, %cst_18 {dimension_numbers = #tpu.dot_dimension_numbers<[1], [0], [0], [1], [0, 0, 1, 1], [], []>} : vector<24x32xbf16>, vector<32x32xbf16>, vector<24x32xf32> -> vector<24x32xf32>
    %33 = arith.addf %26, %32 : vector<24x32xf32>
    %c0_19 = arith.constant 0 : index
    %c0_20 = arith.constant 0 : index
    %c1 = arith.constant 1 : index
    %c0_21 = arith.constant 0 : index
    %34 = vector.load %arg5[%c0_19, %c0_20, %c1, %c0_21] : memref<1x1x42x32xf32, #tpu.memory_space<vmem>>, vector<1x1x24x32xf32>
    %35 = vector.shape_cast %34 : vector<1x1x24x32xf32> to vector<24x32xf32>
    %36 = arith.truncf %35 : vector<24x32xf32> to vector<24x32xbf16>
    %37 = vector.extract_strided_slice %25 {offsets = [1, 0, 0], sizes = [1, 32, 32], strides = [1, 1, 1]} : vector<9x32x32xbf16> to vector<1x32x32xbf16>
    %38 = vector.shape_cast %37 : vector<1x32x32xbf16> to vector<32x32xbf16>
    %cst_22 = arith.constant dense<0.000000e+00> : vector<24x32xf32>
    %39 = tpu.matmul %36, %38, %cst_22 {dimension_numbers = #tpu.dot_dimension_numbers<[1], [0], [0], [1], [0, 0, 1, 1], [], []>} : vector<24x32xbf16>, vector<32x32xbf16>, vector<24x32xf32> -> vector<24x32xf32>
    %40 = arith.addf %33, %39 : vector<24x32xf32>
    %c0_23 = arith.constant 0 : index
    %c0_24 = arith.constant 0 : index
    %c2 = arith.constant 2 : index
    %c0_25 = arith.constant 0 : index
    %41 = vector.load %arg5[%c0_23, %c0_24, %c2, %c0_25] : memref<1x1x42x32xf32, #tpu.memory_space<vmem>>, vector<1x1x24x32xf32>
    %42 = vector.shape_cast %41 : vector<1x1x24x32xf32> to vector<24x32xf32>
    %43 = arith.truncf %42 : vector<24x32xf32> to vector<24x32xbf16>
    %44 = vector.extract_strided_slice %25 {offsets = [2, 0, 0], sizes = [1, 32, 32], strides = [1, 1, 1]} : vector<9x32x32xbf16> to vector<1x32x32xbf16>
    %45 = vector.shape_cast %44 : vector<1x32x32xbf16> to vector<32x32xbf16>
    %cst_26 = arith.constant dense<0.000000e+00> : vector<24x32xf32>
    %46 = tpu.matmul %43, %45, %cst_26 {dimension_numbers = #tpu.dot_dimension_numbers<[1], [0], [0], [1], [0, 0, 1, 1], [], []>} : vector<24x32xbf16>, vector<32x32xbf16>, vector<24x32xf32> -> vector<24x32xf32>
    %47 = arith.addf %40, %46 : vector<24x32xf32>
    %c0_27 = arith.constant 0 : index
    %c0_28 = arith.constant 0 : index
    %c6 = arith.constant 6 : index
    %c0_29 = arith.constant 0 : index
    %48 = vector.load %arg5[%c0_27, %c0_28, %c6, %c0_29] : memref<1x1x42x32xf32, #tpu.memory_space<vmem>>, vector<1x1x24x32xf32>
    %49 = vector.shape_cast %48 : vector<1x1x24x32xf32> to vector<24x32xf32>
    %50 = arith.truncf %49 : vector<24x32xf32> to vector<24x32xbf16>
    %51 = vector.extract_strided_slice %25 {offsets = [3, 0, 0], sizes = [1, 32, 32], strides = [1, 1, 1]} : vector<9x32x32xbf16> to vector<1x32x32xbf16>
    %52 = vector.shape_cast %51 : vector<1x32x32xbf16> to vector<32x32xbf16>
    %cst_30 = arith.constant dense<0.000000e+00> : vector<24x32xf32>
    %53 = tpu.matmul %50, %52, %cst_30 {dimension_numbers = #tpu.dot_dimension_numbers<[1], [0], [0], [1], [0, 0, 1, 1], [], []>} : vector<24x32xbf16>, vector<32x32xbf16>, vector<24x32xf32> -> vector<24x32xf32>
    %54 = arith.addf %47, %53 : vector<24x32xf32>
    %c0_31 = arith.constant 0 : index
    %c0_32 = arith.constant 0 : index
    %c7 = arith.constant 7 : index
    %c0_33 = arith.constant 0 : index
    %55 = vector.load %arg5[%c0_31, %c0_32, %c7, %c0_33] : memref<1x1x42x32xf32, #tpu.memory_space<vmem>>, vector<1x1x24x32xf32>
    %56 = vector.shape_cast %55 : vector<1x1x24x32xf32> to vector<24x32xf32>
    %57 = arith.truncf %56 : vector<24x32xf32> to vector<24x32xbf16>
    %58 = vector.extract_strided_slice %25 {offsets = [4, 0, 0], sizes = [1, 32, 32], strides = [1, 1, 1]} : vector<9x32x32xbf16> to vector<1x32x32xbf16>
    %59 = vector.shape_cast %58 : vector<1x32x32xbf16> to vector<32x32xbf16>
    %cst_34 = arith.constant dense<0.000000e+00> : vector<24x32xf32>
    %60 = tpu.matmul %57, %59, %cst_34 {dimension_numbers = #tpu.dot_dimension_numbers<[1], [0], [0], [1], [0, 0, 1, 1], [], []>} : vector<24x32xbf16>, vector<32x32xbf16>, vector<24x32xf32> -> vector<24x32xf32>
    %61 = arith.addf %54, %60 : vector<24x32xf32>
    %c0_35 = arith.constant 0 : index
    %c0_36 = arith.constant 0 : index
    %c8 = arith.constant 8 : index
    %c0_37 = arith.constant 0 : index
    %62 = vector.load %arg5[%c0_35, %c0_36, %c8, %c0_37] : memref<1x1x42x32xf32, #tpu.memory_space<vmem>>, vector<1x1x24x32xf32>
    %63 = vector.shape_cast %62 : vector<1x1x24x32xf32> to vector<24x32xf32>
    %64 = arith.truncf %63 : vector<24x32xf32> to vector<24x32xbf16>
    %65 = vector.extract_strided_slice %25 {offsets = [5, 0, 0], sizes = [1, 32, 32], strides = [1, 1, 1]} : vector<9x32x32xbf16> to vector<1x32x32xbf16>
    %66 = vector.shape_cast %65 : vector<1x32x32xbf16> to vector<32x32xbf16>
    %cst_38 = arith.constant dense<0.000000e+00> : vector<24x32xf32>
    %67 = tpu.matmul %64, %66, %cst_38 {dimension_numbers = #tpu.dot_dimension_numbers<[1], [0], [0], [1], [0, 0, 1, 1], [], []>} : vector<24x32xbf16>, vector<32x32xbf16>, vector<24x32xf32> -> vector<24x32xf32>
    %68 = arith.addf %61, %67 : vector<24x32xf32>
    %c0_39 = arith.constant 0 : index
    %c0_40 = arith.constant 0 : index
    %c12 = arith.constant 12 : index
    %c0_41 = arith.constant 0 : index
    %69 = vector.load %arg5[%c0_39, %c0_40, %c12, %c0_41] : memref<1x1x42x32xf32, #tpu.memory_space<vmem>>, vector<1x1x24x32xf32>
    %70 = vector.shape_cast %69 : vector<1x1x24x32xf32> to vector<24x32xf32>
    %71 = arith.truncf %70 : vector<24x32xf32> to vector<24x32xbf16>
    %72 = vector.extract_strided_slice %25 {offsets = [6, 0, 0], sizes = [1, 32, 32], strides = [1, 1, 1]} : vector<9x32x32xbf16> to vector<1x32x32xbf16>
    %73 = vector.shape_cast %72 : vector<1x32x32xbf16> to vector<32x32xbf16>
    %cst_42 = arith.constant dense<0.000000e+00> : vector<24x32xf32>
    %74 = tpu.matmul %71, %73, %cst_42 {dimension_numbers = #tpu.dot_dimension_numbers<[1], [0], [0], [1], [0, 0, 1, 1], [], []>} : vector<24x32xbf16>, vector<32x32xbf16>, vector<24x32xf32> -> vector<24x32xf32>
    %75 = arith.addf %68, %74 : vector<24x32xf32>
    %c0_43 = arith.constant 0 : index
    %c0_44 = arith.constant 0 : index
    %c13 = arith.constant 13 : index
    %c0_45 = arith.constant 0 : index
    %76 = vector.load %arg5[%c0_43, %c0_44, %c13, %c0_45] : memref<1x1x42x32xf32, #tpu.memory_space<vmem>>, vector<1x1x24x32xf32>
    %77 = vector.shape_cast %76 : vector<1x1x24x32xf32> to vector<24x32xf32>
    %78 = arith.truncf %77 : vector<24x32xf32> to vector<24x32xbf16>
    %79 = vector.extract_strided_slice %25 {offsets = [7, 0, 0], sizes = [1, 32, 32], strides = [1, 1, 1]} : vector<9x32x32xbf16> to vector<1x32x32xbf16>
    %80 = vector.shape_cast %79 : vector<1x32x32xbf16> to vector<32x32xbf16>
    %cst_46 = arith.constant dense<0.000000e+00> : vector<24x32xf32>
    %81 = tpu.matmul %78, %80, %cst_46 {dimension_numbers = #tpu.dot_dimension_numbers<[1], [0], [0], [1], [0, 0, 1, 1], [], []>} : vector<24x32xbf16>, vector<32x32xbf16>, vector<24x32xf32> -> vector<24x32xf32>
    %82 = arith.addf %75, %81 : vector<24x32xf32>
    %c0_47 = arith.constant 0 : index
    %c0_48 = arith.constant 0 : index
    %c14 = arith.constant 14 : index
    %c0_49 = arith.constant 0 : index
    %83 = vector.load %arg5[%c0_47, %c0_48, %c14, %c0_49] : memref<1x1x42x32xf32, #tpu.memory_space<vmem>>, vector<1x1x24x32xf32>
    %84 = vector.shape_cast %83 : vector<1x1x24x32xf32> to vector<24x32xf32>
    %85 = arith.truncf %84 : vector<24x32xf32> to vector<24x32xbf16>
    %86 = vector.extract_strided_slice %25 {offsets = [8, 0, 0], sizes = [1, 32, 32], strides = [1, 1, 1]} : vector<9x32x32xbf16> to vector<1x32x32xbf16>
    %87 = vector.shape_cast %86 : vector<1x32x32xbf16> to vector<32x32xbf16>
    %cst_50 = arith.constant dense<0.000000e+00> : vector<24x32xf32>
    %88 = tpu.matmul %85, %87, %cst_50 {dimension_numbers = #tpu.dot_dimension_numbers<[1], [0], [0], [1], [0, 0, 1, 1], [], []>} : vector<24x32xbf16>, vector<32x32xbf16>, vector<24x32xf32> -> vector<24x32xf32>
    %89 = arith.addf %82, %88 : vector<24x32xf32>
    %c0_51 = arith.constant 0 : index
    %c0_52 = arith.constant 0 : index
    %90 = vector.load %arg9[%c0_51, %c0_52] : memref<1x1xf32, #tpu.memory_space<vmem>>, vector<1x1xf32>
    %c0_53 = arith.constant 0 : index
    %c0_54 = arith.constant 0 : index
    %c0_55 = arith.constant 0 : index
    %91 = vector.load %arg8[%c0_53, %c0_54, %c0_55] : memref<1x24x1xf32, #tpu.memory_space<vmem>>, vector<1x24x1xf32>
    %92 = vector.shape_cast %91 : vector<1x24x1xf32> to vector<24x1xf32>
    %93 = vector.broadcast %90 : vector<1x1xf32> to vector<24x1xf32>
    %94 = arith.mulf %93, %92 : vector<24x1xf32>
    %95 = vector.broadcast %94 : vector<24x1xf32> to vector<24x32xf32>
    %96 = arith.addf %89, %95 : vector<24x32xf32>
    %c0_56 = arith.constant 0 : index
    %c0_57 = arith.constant 0 : index
    %97 = vector.load %arg10[%c0_56, %c0_57] : memref<1x32xf32, #tpu.memory_space<vmem>>, vector<1x32xf32>
    %98 = vector.broadcast %97 : vector<1x32xf32> to vector<24x32xf32>
    %99 = arith.addf %96, %98 : vector<24x32xf32>
    %cst_58 = arith.constant 0.000000e+00 : f32
    %100 = vector.broadcast %cst_58 : f32 to vector<24x32xf32>
    %101 = arith.cmpf oge, %99, %100 : vector<24x32xf32>
    %cst_59 = arith.constant 2.000000e-01 : f32
    %102 = vector.broadcast %cst_59 : f32 to vector<24x32xf32>
    %103 = arith.mulf %102, %99 : vector<24x32xf32>
    %104 = arith.select %101, %99, %103 : vector<24x32xi1>, vector<24x32xf32>
    %c0_60 = arith.constant 0 : index
    %c0_61 = arith.constant 0 : index
    %c0_62 = arith.constant 0 : index
    %105 = vector.load %arg11[%c0_60, %c0_61, %c0_62] : memref<1x24x32xf32, #tpu.memory_space<vmem>>, vector<1x24x32xf32>
    %106 = vector.shape_cast %105 : vector<1x24x32xf32> to vector<24x32xf32>
    %107 = vector.shape_cast %104 : vector<24x32xf32> to vector<1x24x32xf32>
    tpu.vector_store %arg11[%c0_60, %c0_61, %c0_62], %107 {strides = array<i32>} : memref<1x24x32xf32, #tpu.memory_space<vmem>>, vector<1x24x32xf32>,
    return
  }
  func.func @transform_0(%arg0: i32, %arg1: i32) -> (i32, i32, i32) {
    %c0_i32 = arith.constant 0 : i32
    %c0_i32_0 = arith.constant 0 : i32
    %c0_i32_1 = arith.constant 0 : i32
    return %arg0, %c0_i32, %c0_i32_0 : i32, i32, i32
  }
  func.func @transform_1(%arg0: i32, %arg1: i32) -> (i32, i32) {
    %c0_i32 = arith.constant 0 : i32
    %c0_i32_0 = arith.constant 0 : i32
    %c0_i32_1 = arith.constant 0 : i32
    return %c0_i32, %c0_i32_0 : i32, i32
  }
  func.func @transform_2(%arg0: i32, %arg1: i32) -> (i32, i32) {
    %c0_i32 = arith.constant 0 : i32
    %c0_i32_0 = arith.constant 0 : i32
    %c0_i32_1 = arith.constant 0 : i32
    return %c0_i32, %c0_i32_0 : i32, i32
  }
  func.func @transform_3(%arg0: i32, %arg1: i32) -> (i32, i32, i32, i32) {
    %c0_i32 = arith.constant 0 : i32
    %c0_i32_0 = arith.constant 0 : i32
    %c0_i32_1 = arith.constant 0 : i32
    return %arg0, %arg1, %c0_i32, %c0_i32_0 : i32, i32, i32, i32
  }
  func.func @transform_4(%arg0: i32, %arg1: i32) -> (i32, i32, i32) {
    %c0_i32 = arith.constant 0 : i32
    %c0_i32_0 = arith.constant 0 : i32
    %c0_i32_1 = arith.constant 0 : i32
    %c0_i32_2 = arith.constant 0 : i32
    return %c0_i32, %c0_i32_0, %c0_i32_1 : i32, i32, i32
  }
  func.func @transform_5(%arg0: i32, %arg1: i32) -> (i32, i32) {
    %c0_i32 = arith.constant 0 : i32
    %c0_i32_0 = arith.constant 0 : i32
    %c0_i32_1 = arith.constant 0 : i32
    return %c0_i32, %c0_i32_0 : i32, i32
  }
  func.func @transform_6(%arg0: i32, %arg1: i32) -> (i32, i32, i32) {
    %c0_i32 = arith.constant 0 : i32
    %c0_i32_0 = arith.constant 0 : i32
    return %arg0, %arg1, %c0_i32 : i32, i32, i32
  }
  func.func @transform_7(%arg0: i32, %arg1: i32) -> (i32, i32) {
    %c0_i32 = arith.constant 0 : i32
    %c0_i32_0 = arith.constant 0 : i32
    %c0_i32_1 = arith.constant 0 : i32
    return %c0_i32, %c0_i32_0 : i32, i32
  }
  func.func @transform_8(%arg0: i32, %arg1: i32) -> (i32, i32) {
    %c0_i32 = arith.constant 0 : i32
    %c0_i32_0 = arith.constant 0 : i32
    %c0_i32_1 = arith.constant 0 : i32
    return %c0_i32, %c0_i32_0 : i32, i32
  }
  func.func @transform_9(%arg0: i32, %arg1: i32) -> (i32, i32, i32) {
    %c0_i32 = arith.constant 0 : i32
    %c0_i32_0 = arith.constant 0 : i32
    return %arg0, %arg1, %c0_i32 : i32, i32, i32
  }
}

</mosaic_0001>

<llo_original>
// kernel: tpu_custom_call.1
$region0: #{tpu_custom_call.1}
  #allocation0 [shape = 'u32[]', space=smem, size = 0x4, offset = 0x4, fixed_abs, tag = 'smem constant byte address 0x4 - core index']
  #allocation1 [shape = 'u32[72,128]{1,0:T(1,128)}', space=vmem, size = 0x9000, scoped, tag = 'internal scratch']
  #allocation2 [shape = 'f32[1,1]{1,0:T(1,128)S(1)}', space=vmem, size = 0x200, scoped, tag = 'scoped memory for tpu_custom_call.1']
  %s0 = inlined_call_operand.vmem [shape: f32[2,1,32], index: 0, kind: input, shape index: {}]
  %s1 = inlined_call_operand.vmem [shape: f32[32,32], index: 1, kind: input, shape index: {}]
  %s2 = inlined_call_operand.vmem [shape: f32[32,1], index: 2, kind: input, shape index: {}]
  %s3 = inlined_call_operand.vmem [shape: f32[2,1,42,32], index: 3, kind: input, shape index: {}]
  %s4 = inlined_call_operand.hbm [shape: f32[9,32,32], index: 4, kind: input, shape index: {}]
  %s5 = inlined_call_operand.vmem [shape: f32[32,32], index: 5, kind: input, shape index: {}]
  %s6 = inlined_call_operand.vmem [shape: f32[2,24,1], index: 6, kind: input, shape index: {}]
  %s7 = inlined_call_operand.<no memory space> [shape: f32[1,1], index: 7, kind: input, shape index: {}]
  %s8 = inlined_call_operand.vmem [shape: f32[1,32], index: 8, kind: input, shape index: {}]
  %s9 = inlined_call_operand.hbm [shape: f32[2,24,32], index: 9, kind: output, shape index: {}]
  %s10 = sld [smem:[#allocation0]]
  $region73: #{tpu_custom_call.1} parent=0
    _
  %s12 = ssub.s32 1, %s10
  %s13 = scalar_select 0, %s12, %s10
  %v14 = vstv %s7
  %15 = vst [vmem:[#allocation2] sm:$0x1] %v14
  $region1: #{tpu_custom_call.1} parent=0
    #allocation3 [shape = 'u8[147456]{0}', space=vmem, size = 0x24000, scoped, tag = 'input window, operand 4, single buffered']
    #allocation4 [shape = 's32[2]{0}', space=sflag, size = 0x8, scoped, tag = 'scoped memory for tpu_custom_call.1']
    #allocation5 [shape = 's32[2]{0}', space=sflag, size = 0x8, scoped, tag = 'scoped memory for tpu_custom_call.1']
    #allocation6 [shape = 'u8[24576]{0}', space=vmem, size = 0x6000, scoped, tag = 'output window, operand 0']
    %16 = vsyncpa [#allocation4], 0
    %17 = vsyncpa [#allocation5], 0
    %s18 = scalar_lea.sflag [#allocation5], 1
    %19 = vsyncpa %s18, 0
    loop: start=0, step=1, limit=4
    $region2: #{tpu_custom_call.1} parent=1 // loop_pre_header
      _
    $region3: #{tpu_custom_call.1} parent=1 // loop_header
      %s21 = sphi 0, %s25
      %p22 = scmp.ge.s32.totalorder %s21, 4
      %s28 = sphi 0, %s40
      %s29 = sphi 0, %s36
      %s30 = sphi 0, %s28
      %s31 = sphi 0, %s29
      %s32 = sphi 0, %s30
      %s33 = sphi 0, %s31
      %s43 = sphi 0, %s45
      %s46 = sphi 0, %s43
      %s47 = sphi 0, %s46
      %s63 = sphi 0, %s47
      %s67 = sphi 0, %s67
      %s69 = sphi 0, %s67
      %s70 = sphi 0, %s69
      %s84 = sphi 0, %s70
      %s88 = sphi 0, %s88
      %s90 = sphi 0, %s88
      %s91 = sphi 0, %s90
      %s105 = sphi 0, %s91
      %s113 = sphi 0, %s115
      %s116 = sphi 0, %s113
      %s117 = sphi 0, %s116
      %s133 = sphi 0, %s117
      %s137 = sphi 0, %s137
      %s139 = sphi 0, %s137
      %s140 = sphi 0, %s139
      %s154 = sphi 0, %s140
      %s158 = sphi 0, %s158
      %s160 = sphi 0, %s158
      %s161 = sphi 0, %s160
      %s175 = sphi 0, %s161
      %s183 = sphi 0, %s185
      %s186 = sphi 0, %s183
      %s187 = sphi 0, %s186
      %s203 = sphi 0, %s187
      %s207 = sphi 0, %s207
      %s209 = sphi 0, %s207
      %s210 = sphi 0, %s209
      %s224 = sphi 0, %s210
      %s228 = sphi 0, %s228
      %s230 = sphi 0, %s228
      %s231 = sphi 0, %s230
      %s245 = sphi 0, %s231
      %s253 = sphi 0, %s255
      %s256 = sphi 0, %s253
      %s257 = sphi 0, %s256
      %s273 = sphi 0, %s257
    $region4: #{tpu_custom_call.1} parent=1 // loop_header_branch
      %24 = sbr.rel (%p22) target = $region8
    $region5: #{tpu_custom_call.1} parent=1 // loop_body
      %s26 = ssub.s32 %s21, 1
      %s27 = ssub.s32 %s21, 2
      %s34 = sadd.s32 1, %s29
      %p35 = scmp.ge.s32.totalorder %s34, 1
      %s36 = scalar_select %p35, 0, %s34
      %s37 = sadd.s32 1, %s28
      %s38 = scalar_select %p35, %s37, %s28
      %p39 = scmp.ge.s32.totalorder %s38, 2
      %s40 = scalar_select %p39, 0, %s38
      %s41 = ssub.s32 %s28, %s40
      %p42 = scmp.eq.s32.totalorder %s41, 0
      %s44 = sadd.s32 %s43, 1
      %s45 = scalar_select %p42, %s43, %s44
      %p48 = pneg %p42
      %p49 = scmp.eq.s32.totalorder %s21, 1
      %p50 = por %p48, %p49
      %p51 = scmp.ne.s32.totalorder %s43, %s46
      %p52 = scmp.eq.s32.totalorder %s21, 0
      %p53 = por %p51, %p52
      %p54 = scmp.ne.s32.totalorder %s43, %s46
      %p55 = scmp.eq.s32.totalorder %s26, 1
      %p56 = por %p54, %p55
      %p57 = scmp.ne.s32.totalorder %s46, %s47
      %p58 = scmp.eq.s32.totalorder %s26, 0
      %p59 = por %p57, %p58
      %p60 = scmp.ne.s32.totalorder %s46, %s47
      %p61 = scmp.eq.s32.totalorder %s27, 1
      %p62 = por %p60, %p61
      %p64 = scmp.ne.s32.totalorder %s47, %s63
      %p65 = scmp.eq.s32.totalorder %s27, 0
      %p66 = por %p64, %p65
      %s68 = sadd.s32 %s67, 1
      %p71 = scmp.eq.s32.totalorder %s21, 1
      %p72 = scmp.ne.s32.totalorder %s67, %s69
      %p73 = scmp.eq.s32.totalorder %s21, 0
      %p74 = por %p72, %p73
      %p75 = scmp.ne.s32.totalorder %s67, %s69
      %p76 = scmp.eq.s32.totalorder %s26, 1
      %p77 = por %p75, %p76
      %p78 = scmp.ne.s32.totalorder %s69, %s70
      %p79 = scmp.eq.s32.totalorder %s26, 0
      %p80 = por %p78, %p79
      %p81 = scmp.ne.s32.totalorder %s69, %s70
      %p82 = scmp.eq.s32.totalorder %s27, 1
      %p83 = por %p81, %p82
      %p85 = scmp.ne.s32.totalorder %s70, %s84
      %p86 = scmp.eq.s32.totalorder %s27, 0
      %p87 = por %p85, %p86
      %s89 = sadd.s32 %s88, 1
      %p92 = scmp.eq.s32.totalorder %s21, 1
      %p93 = scmp.ne.s32.totalorder %s88, %s90
      %p94 = scmp.eq.s32.totalorder %s21, 0
      %p95 = por %p93, %p94
      %p96 = scmp.ne.s32.totalorder %s88, %s90
      %p97 = scmp.eq.s32.totalorder %s26, 1
      %p98 = por %p96, %p97
      %p99 = scmp.ne.s32.totalorder %s90, %s91
      %p100 = scmp.eq.s32.totalorder %s26, 0
      %p101 = por %p99, %p100
      %p102 = scmp.ne.s32.totalorder %s90, %s91
      %p103 = scmp.eq.s32.totalorder %s27, 1
      %p104 = por %p102, %p103
      %p106 = scmp.ne.s32.totalorder %s91, %s105
      %p107 = scmp.eq.s32.totalorder %s27, 0
      %p108 = por %p106, %p107
      %s109 = ssub.s32 %s28, %s40
      %s110 = ssub.s32 %s29, %s36
      %s111 = sor.u32 %s109, %s110
      %p112 = scmp.eq.s32.totalorder %s111, 0
      %s114 = sadd.s32 %s113, 1
      %s115 = scalar_select %p112, %s113, %s114
      %p118 = pneg %p112
      %p119 = scmp.eq.s32.totalorder %s21, 1
      %p120 = por %p118, %p119
      %p121 = scmp.ne.s32.totalorder %s113, %s116
      %p122 = scmp.eq.s32.totalorder %s21, 0
      %p123 = por %p121, %p122
      %p124 = scmp.ne.s32.totalorder %s113, %s116
      %p125 = scmp.eq.s32.totalorder %s26, 1
      %p126 = por %p124, %p125
      %p127 = scmp.ne.s32.totalorder %s116, %s117
      %p128 = scmp.eq.s32.totalorder %s26, 0
      %p129 = por %p127, %p128
      %p130 = scmp.ne.s32.totalorder %s116, %s117
      %p131 = scmp.eq.s32.totalorder %s27, 1
      %p132 = por %p130, %p131
      %p134 = scmp.ne.s32.totalorder %s117, %s133
      %p135 = scmp.eq.s32.totalorder %s27, 0
      %p136 = por %p134, %p135
      %s138 = sadd.s32 %s137, 1
      %p141 = scmp.eq.s32.totalorder %s21, 1
      %p142 = scmp.ne.s32.totalorder %s137, %s139
      %p143 = scmp.eq.s32.totalorder %s21, 0
      %p144 = por %p142, %p143
      %p145 = scmp.ne.s32.totalorder %s137, %s139
      %p146 = scmp.eq.s32.totalorder %s26, 1
      %p147 = por %p145, %p146
      %p148 = scmp.ne.s32.totalorder %s139, %s140
      %p149 = scmp.eq.s32.totalorder %s26, 0
      %p150 = por %p148, %p149
      %p151 = scmp.ne.s32.totalorder %s139, %s140
      %p152 = scmp.eq.s32.totalorder %s27, 1
      %p153 = por %p151, %p152
      %p155 = scmp.ne.s32.totalorder %s140, %s154
      %p156 = scmp.eq.s32.totalorder %s27, 0
      %p157 = por %p155, %p156
      %s159 = sadd.s32 %s158, 1
      %p162 = scmp.eq.s32.totalorder %s21, 1
      %p163 = scmp.ne.s32.totalorder %s158, %s160
      %p164 = scmp.eq.s32.totalorder %s21, 0
      %p165 = por %p163, %p164
      %p166 = scmp.ne.s32.totalorder %s158, %s160
      %p167 = scmp.eq.s32.totalorder %s26, 1
      %p168 = por %p166, %p167
      %p169 = scmp.ne.s32.totalorder %s160, %s161
      %p170 = scmp.eq.s32.totalorder %s26, 0
      %p171 = por %p169, %p170
      %p172 = scmp.ne.s32.totalorder %s160, %s161
      %p173 = scmp.eq.s32.totalorder %s27, 1
      %p174 = por %p172, %p173
      %p176 = scmp.ne.s32.totalorder %s161, %s175
      %p177 = scmp.eq.s32.totalorder %s27, 0
      %p178 = por %p176, %p177
      %s179 = ssub.s32 %s28, %s40
      %s180 = ssub.s32 %s29, %s36
      %s181 = sor.u32 %s179, %s180
      %p182 = scmp.eq.s32.totalorder %s181, 0
      %s184 = sadd.s32 %s183, 1
      %s185 = scalar_select %p182, %s183, %s184
      %p188 = pneg %p182
      %p189 = scmp.eq.s32.totalorder %s21, 1
      %p190 = por %p188, %p189
      %p191 = scmp.ne.s32.totalorder %s183, %s186
      %p192 = scmp.eq.s32.totalorder %s21, 0
      %p193 = por %p191, %p192
      %p194 = scmp.ne.s32.totalorder %s183, %s186
      %p195 = scmp.eq.s32.totalorder %s26, 1
      %p196 = por %p194, %p195
      %p197 = scmp.ne.s32.totalorder %s186, %s187
      %p198 = scmp.eq.s32.totalorder %s26, 0
      %p199 = por %p197, %p198
      %p200 = scmp.ne.s32.totalorder %s186, %s187
      %p201 = scmp.eq.s32.totalorder %s27, 1
      %p202 = por %p200, %p201
      %p204 = scmp.ne.s32.totalorder %s187, %s203
      %p205 = scmp.eq.s32.totalorder %s27, 0
      %p206 = por %p204, %p205
      %s208 = sadd.s32 %s207, 1
      %p211 = scmp.eq.s32.totalorder %s21, 1
      %p212 = scmp.ne.s32.totalorder %s207, %s209
      %p213 = scmp.eq.s32.totalorder %s21, 0
      %p214 = por %p212, %p213
      %p215 = scmp.ne.s32.totalorder %s207, %s209
      %p216 = scmp.eq.s32.totalorder %s26, 1
      %p217 = por %p215, %p216
      %p218 = scmp.ne.s32.totalorder %s209, %s210
      %p219 = scmp.eq.s32.totalorder %s26, 0
      %p220 = por %p218, %p219
      %p221 = scmp.ne.s32.totalorder %s209, %s210
      %p222 = scmp.eq.s32.totalorder %s27, 1
      %p223 = por %p221, %p222
      %p225 = scmp.ne.s32.totalorder %s210, %s224
      %p226 = scmp.eq.s32.totalorder %s27, 0
      %p227 = por %p225, %p226
      %s229 = sadd.s32 %s228, 1
      %p232 = scmp.eq.s32.totalorder %s21, 1
      %p233 = scmp.ne.s32.totalorder %s228, %s230
      %p234 = scmp.eq.s32.totalorder %s21, 0
      %p235 = por %p233, %p234
      %p236 = scmp.ne.s32.totalorder %s228, %s230
      %p237 = scmp.eq.s32.totalorder %s26, 1
      %p238 = por %p236, %p237
      %p239 = scmp.ne.s32.totalorder %s230, %s231
      %p240 = scmp.eq.s32.totalorder %s26, 0
      %p241 = por %p239, %p240
      %p242 = scmp.ne.s32.totalorder %s230, %s231
      %p243 = scmp.eq.s32.totalorder %s27, 1
      %p244 = por %p242, %p243
      %p246 = scmp.ne.s32.totalorder %s231, %s245
      %p247 = scmp.eq.s32.totalorder %s27, 0
      %p248 = por %p246, %p247
      %s249 = ssub.s32 %s28, %s40
      %s250 = ssub.s32 %s29, %s36
      %s251 = sor.u32 %s249, %s250
      %p252 = scmp.eq.s32.totalorder %s251, 0
      %s254 = sadd.s32 %s253, 1
      %s255 = scalar_select %p252, %s253, %s254
      %p258 = pneg %p252
      %p259 = scmp.eq.s32.totalorder %s21, 1
      %p260 = por %p258, %p259
      %p261 = scmp.ne.s32.totalorder %s253, %s256
      %p262 = scmp.eq.s32.totalorder %s21, 0
      %p263 = por %p261, %p262
      %p264 = scmp.ne.s32.totalorder %s253, %s256
      %p265 = scmp.eq.s32.totalorder %s26, 1
      %p266 = por %p264, %p265
      %p267 = scmp.ne.s32.totalorder %s256, %s257
      %p268 = scmp.eq.s32.totalorder %s26, 0
      %p269 = por %p267, %p268
      %p270 = scmp.ne.s32.totalorder %s256, %s257
      %p271 = scmp.eq.s32.totalorder %s27, 1
      %p272 = por %p270, %p271
      %p274 = scmp.ne.s32.totalorder %s257, %s273
      %p275 = scmp.eq.s32.totalorder %s27, 0
      %p276 = por %p274, %p275
      %p277 = scmp.le.s32.totalorder 1, %s21
      %p278 = scmp.lt.s32.totalorder %s21, 3
      %p279 = pnand %p277, %p278
      %p280 = pneg %p279
      // Predicated region
      $region9: #{tpu_custom_call.1} parent=5 // pred_check
        _
      $region10: #{tpu_custom_call.1} parent=5 // pred_check_branch
        %282 = sbr.rel (%p279) target = $region12
      $region11: #{tpu_custom_call.1} parent=5 // pred_region
        %s283 = ssub.s32 %s21, 1
        // Predicated region
        $region13: #{tpu_custom_call.1} parent=11 // pred_check
          %p284 = pneg %p80
        $region14: #{tpu_custom_call.1} parent=11 // pred_check_branch
          %286 = sbr.rel (%p284) target = $region16
        $region15: #{tpu_custom_call.1} parent=11 // pred_region
          _
        $region16: #{tpu_custom_call.1} parent=11 // pred_fallthru
          _
        // Predicated region
        $region17: #{tpu_custom_call.1} parent=11 // pred_check
          %p287 = pneg %p101
        $region18: #{tpu_custom_call.1} parent=11 // pred_check_branch
          %289 = sbr.rel (%p287) target = $region20
        $region19: #{tpu_custom_call.1} parent=11 // pred_region
          _
        $region20: #{tpu_custom_call.1} parent=11 // pred_fallthru
          _
        // Predicated region
        $region21: #{tpu_custom_call.1} parent=11 // pred_check
          %p290 = pneg %p150
        $region22: #{tpu_custom_call.1} parent=11 // pred_check_branch
          %292 = sbr.rel (%p290) target = $region24
        $region23: #{tpu_custom_call.1} parent=11 // pred_region
          %294 = vsyncadd [#allocation4], 0
          %s295 = sshll.u32 %s4, 4
          %s296 = int_to_ptr.hbm [resolvable:$true] %s295
          %s297 = sshll.u32 [#allocation3], 4
          %s298 = int_to_ptr.vmem [resolvable:$true] %s297
          %303 = dma.hbm_to_vmem [thread:$0]  %s296, 4608, %s298, [#allocation4], 128, 128, 8
        $region24: #{tpu_custom_call.1} parent=11 // pred_fallthru
          _
        // Predicated region
        $region25: #{tpu_custom_call.1} parent=11 // pred_check
          %p304 = pneg %p171
        $region26: #{tpu_custom_call.1} parent=11 // pred_check_branch
          %306 = sbr.rel (%p304) target = $region28
        $region27: #{tpu_custom_call.1} parent=11 // pred_region
          _
        $region28: #{tpu_custom_call.1} parent=11 // pred_fallthru
          _
        // Predicated region
        $region29: #{tpu_custom_call.1} parent=11 // pred_check
          %p307 = pneg %p220
        $region30: #{tpu_custom_call.1} parent=11 // pred_check_branch
          %309 = sbr.rel (%p307) target = $region32
        $region31: #{tpu_custom_call.1} parent=11 // pred_region
          _
        $region32: #{tpu_custom_call.1} parent=11 // pred_fallthru
          _
        // Predicated region
        $region33: #{tpu_custom_call.1} parent=11 // pred_check
          %p310 = pneg %p241
        $region34: #{tpu_custom_call.1} parent=11 // pred_check_branch
          %312 = sbr.rel (%p310) target = $region36
        $region35: #{tpu_custom_call.1} parent=11 // pred_region
          _
        $region36: #{tpu_custom_call.1} parent=11 // pred_fallthru
          _
      $region12: #{tpu_custom_call.1} parent=5 // pred_fallthru
        _
      %p313 = scmp.lt.s32.totalorder %s21, 2
      // Predicated region
      $region37: #{tpu_custom_call.1} parent=5 // pred_check
        %p314 = pneg %p313
      $region38: #{tpu_custom_call.1} parent=5 // pred_check_branch
        %316 = sbr.rel (%p314) target = $region40
      $region39: #{tpu_custom_call.1} parent=5 // pred_region
        // Predicated region
        $region41: #{tpu_custom_call.1} parent=39 // pred_check
          %p317 = pneg %p53
        $region42: #{tpu_custom_call.1} parent=39 // pred_check_branch
          %319 = sbr.rel (%p317) target = $region44
        $region43: #{tpu_custom_call.1} parent=39 // pred_region
          %p320 = scmp.lt.s32.totalorder %s28, 1
          %s321 = scalar_select %p320, %s28, 1
          %s322 = scalar_lea.vmem %s0, %s321
        $region44: #{tpu_custom_call.1} parent=39 // pred_fallthru
          _
        // Predicated region
        $region45: #{tpu_custom_call.1} parent=39 // pred_check
          %p323 = pneg %p123
        $region46: #{tpu_custom_call.1} parent=39 // pred_check_branch
          %325 = sbr.rel (%p323) target = $region48
        $region47: #{tpu_custom_call.1} parent=39 // pred_region
          %p326 = scmp.lt.s32.totalorder %s28, 1
          %s327 = scalar_select %p326, %s28, 1
          %p328 = scmp.lt.s32.totalorder %s29, 0
          %s329 = scalar_select %p328, %s29, 0
          %s330 = smul.addr %s329, 6
          %s331 = smul.addr %s327, 6
          %s332 = sadd.s32 %s330, %s331
          %s333 = smul.addr %s332, 8
          %s334 = scalar_lea.vmem %s3, %s333
        $region48: #{tpu_custom_call.1} parent=39 // pred_fallthru
          _
        // Predicated region
        $region49: #{tpu_custom_call.1} parent=39 // pred_check
          %p335 = pneg %p193
        $region50: #{tpu_custom_call.1} parent=39 // pred_check_branch
          %337 = sbr.rel (%p335) target = $region52
        $region51: #{tpu_custom_call.1} parent=39 // pred_region
          %s338 = smul.u32 3, %s29
          %p339 = scmp.lt.s32.totalorder %s28, 1
          %s340 = scalar_select %p339, %s28, 1
          %p341 = scmp.lt.s32.totalorder %s338, 2
          %s342 = scalar_select %p341, %s338, 2
          %s343 = smul.addr %s340, 3
          %s344 = sadd.s32 %s342, %s343
          %s345 = smul.addr %s344, 8
          %s346 = scalar_lea.vmem %s6, %s345
          %s347 = smul.u32 3, %s29
        $region52: #{tpu_custom_call.1} parent=39 // pred_fallthru
          _
      $region40: #{tpu_custom_call.1} parent=5 // pred_fallthru
        _
      %p348 = scmp.le.s32.totalorder 1, %s21
      %p349 = scmp.lt.s32.totalorder %s21, 3
      %p350 = pnand %p348, %p349
      %p351 = pneg %p350
      // Predicated region
      $region53: #{tpu_custom_call.1} parent=5 // pred_check
        _
      $region54: #{tpu_custom_call.1} parent=5 // pred_check_branch
        %353 = sbr.rel (%p350) target = $region56
      $region55: #{tpu_custom_call.1} parent=5 // pred_region
        %s354 = ssub.s32 %s21, 1
        // Predicated region
        $region57: #{tpu_custom_call.1} parent=55 // pred_check
          %p355 = pneg %p150
        $region58: #{tpu_custom_call.1} parent=55 // pred_check_branch
          %357 = sbr.rel (%p355) target = $region60
        $region59: #{tpu_custom_call.1} parent=55 // pred_region
          %359 = dma.done [#allocation4], 4608
        $region60: #{tpu_custom_call.1} parent=55 // pred_fallthru
          _
        %p360 = scmp.lt.s32.totalorder %s30, 1
        %s361 = scalar_select %p360, %s30, 1
        %s362 = scalar_lea.vmem %s0, %s361
        %p363 = pneg %p59
        %p364 = pneg %p56
        %p365 = pneg %p80
        %p366 = pneg %p77
        %p367 = pneg %p101
        %p368 = pneg %p98
        %p369 = scmp.lt.s32.totalorder %s30, 1
        %s370 = scalar_select %p369, %s30, 1
        %p371 = scmp.lt.s32.totalorder %s31, 0
        %s372 = scalar_select %p371, %s31, 0
        %s373 = smul.addr %s372, 6
        %s374 = smul.addr %s370, 6
        %s375 = sadd.s32 %s373, %s374
        %s376 = smul.addr %s375, 8
        %s377 = scalar_lea.vmem %s3, %s376
        %p378 = pneg %p129
        %p379 = pneg %p126
        %p380 = pneg %p150
        %p381 = pneg %p147
        %p382 = pneg %p171
        %p383 = pneg %p168
        %s384 = smul.u32 3, %s31
        %p385 = scmp.lt.s32.totalorder %s30, 1
        %s386 = scalar_select %p385, %s30, 1
        %p387 = scmp.lt.s32.totalorder %s384, 2
        %s388 = scalar_select %p387, %s384, 2
        %s389 = smul.addr %s386, 3
        %s390 = sadd.s32 %s388, %s389
        %s391 = smul.addr %s390, 8
        %s392 = scalar_lea.vmem %s6, %s391
        %p393 = pneg %p199
        %p394 = pneg %p196
        %p395 = pneg %p220
        %p396 = pneg %p217
        %p397 = pneg %p241
        %p398 = pneg %p238
        %p399 = pneg %p269
        %p400 = pneg %p266
        %s401 = sand.u32 %s256, 1
        %s402 = scalar_lea.sflag [#allocation5], %s401
        %s403 = sand.u32 %s256, 1
        %s404 = smul.addr %s403, 24
        %s405 = scalar_lea.vmem [#allocation6], %s404
        %p406 = scmp.lt.s32.totalorder %s30, 1
        %s407 = scalar_select %p406, %s30, 1
        %s408 = scalar_lea.vmem %s0, %s407
        %p409 = scmp.lt.s32.totalorder %s30, 1
        %s410 = scalar_select %p409, %s30, 1
        %p411 = scmp.lt.s32.totalorder %s31, 0
        %s412 = scalar_select %p411, %s31, 0
        %s413 = smul.addr %s412, 6
        %s414 = smul.addr %s410, 6
        %s415 = sadd.s32 %s413, %s414
        %s416 = smul.addr %s415, 8
        %s417 = scalar_lea.vmem %s3, %s416
        %s418 = smul.u32 3, %s31
        %p419 = scmp.lt.s32.totalorder %s30, 1
        %s420 = scalar_select %p419, %s30, 1
        %p421 = scmp.lt.s32.totalorder %s418, 2
        %s422 = scalar_select %p421, %s418, 2
        %s423 = smul.addr %s420, 3
        %s424 = sadd.s32 %s422, %s423
        %s425 = smul.addr %s424, 8
        %s426 = scalar_lea.vmem %s6, %s425
        %s427 = smul.u32 3, %s31
        %s428 = smul.u32 3, %s31
        %v430 = vld [vmem:[%s1] sm:$0xff]
        %v431 = vld [vmem:[%s1 + $0x8] sm:$0xff]
        %v432 = vld [vmem:[%s1 + $0x10] sm:$0xff]
        %v433 = vld [vmem:[%s1 + $0x18] sm:$0xff]
        %v434 = vld [vmem:[%s408] sm:$0x1]
        %v436 = vperm.slane %v434, 0
        %v438 = vmul.f32 %v430, %v436
        %v439 = vmul.f32 %v431, %v436
        %v440 = vmul.f32 %v432, %v436
        %v441 = vmul.f32 %v433, %v436
        %vm442 = vcmask 261120
        %v443 = vsel %vm442, %v438, 0.0
        %444 = vadd.xlane.f32.xlu0 %v443
        %v445 = vpop.xlane.xlu0 %444
        %v446 = vsel %vm442, %v439, 0.0
        %447 = vadd.xlane.f32.xlu0 %v446
        %v448 = vpop.xlane.xlu0 %447
        %v449 = vsel %vm442, %v440, 0.0
        %450 = vadd.xlane.f32.xlu0 %v449
        %v451 = vpop.xlane.xlu0 %450
        %v452 = vsel %vm442, %v441, 0.0
        %453 = vadd.xlane.f32.xlu0 %v452
        %v454 = vpop.xlane.xlu0 %453
        %v455 = vld [vmem:[%s2] sm:$0xff]
        %v456 = vld [vmem:[%s2 + $0x8] sm:$0xff]
        %v457 = vld [vmem:[%s2 + $0x10] sm:$0xff]
        %v458 = vld [vmem:[%s2 + $0x18] sm:$0xff]
        %v459 = vadd.f32 %v445, %v455
        %v460 = vadd.f32 %v448, %v456
        %v461 = vadd.f32 %v451, %v457
        %v462 = vadd.f32 %v454, %v458
        %v463 = vld [vmem:[#allocation3] sm:$0xff]
        %v464 = vld [vmem:[#allocation3 + $0x8] sm:$0xff]
        %v465 = vld [vmem:[#allocation3 + $0x10] sm:$0xff]
        %v466 = vld [vmem:[#allocation3 + $0x18] sm:$0xff]
        %v467 = vld [vmem:[#allocation3 + $0x20] sm:$0xff]
        %v468 = vld [vmem:[#allocation3 + $0x28] sm:$0xff]
        %v469 = vld [vmem:[#allocation3 + $0x30] sm:$0xff]
        %v470 = vld [vmem:[#allocation3 + $0x38] sm:$0xff]
        %v471 = vld [vmem:[#allocation3 + $0x40] sm:$0xff]
        %v472 = vld [vmem:[#allocation3 + $0x48] sm:$0xff]
        %v473 = vld [vmem:[#allocation3 + $0x50] sm:$0xff]
        %v474 = vld [vmem:[#allocation3 + $0x58] sm:$0xff]
        %v475 = vld [vmem:[#allocation3 + $0x60] sm:$0xff]
        %v476 = vld [vmem:[#allocation3 + $0x68] sm:$0xff]
        %v477 = vld [vmem:[#allocation3 + $0x70] sm:$0xff]
        %v478 = vld [vmem:[#allocation3 + $0x78] sm:$0xff]
        %v479 = vld [vmem:[#allocation3 + $0x80] sm:$0xff]
        %v480 = vld [vmem:[#allocation3 + $0x88] sm:$0xff]
        %v481 = vld [vmem:[#allocation3 + $0x90] sm:$0xff]
        %v482 = vld [vmem:[#allocation3 + $0x98] sm:$0xff]
        %v483 = vld [vmem:[#allocation3 + $0xa0] sm:$0xff]
        %v484 = vld [vmem:[#allocation3 + $0xa8] sm:$0xff]
        %v485 = vld [vmem:[#allocation3 + $0xb0] sm:$0xff]
        %v486 = vld [vmem:[#allocation3 + $0xb8] sm:$0xff]
        %v487 = vld [vmem:[#allocation3 + $0xc0] sm:$0xff]
        %v488 = vld [vmem:[#allocation3 + $0xc8] sm:$0xff]
        %v489 = vld [vmem:[#allocation3 + $0xd0] sm:$0xff]
        %v490 = vld [vmem:[#allocation3 + $0xd8] sm:$0xff]
        %v491 = vld [vmem:[#allocation3 + $0xe0] sm:$0xff]
        %v492 = vld [vmem:[#allocation3 + $0xe8] sm:$0xff]
        %v493 = vld [vmem:[#allocation3 + $0xf0] sm:$0xff]
        %v494 = vld [vmem:[#allocation3 + $0xf8] sm:$0xff]
        %v495 = vld [vmem:[#allocation3 + $0x100] sm:$0xff]
        %v496 = vld [vmem:[#allocation3 + $0x108] sm:$0xff]
        %v497 = vld [vmem:[#allocation3 + $0x110] sm:$0xff]
        %v498 = vld [vmem:[#allocation3 + $0x118] sm:$0xff]
        %500 = vset.pattern.permute.xlu0 0
        %501 = vperm.xlu0 %500, %v459
        %v502 = vpop.permute.xlu0 %501
        %505 = vset.pattern.permute.xlu0 0
        %506 = vperm.xlu0 %505, %v460
        %v507 = vpop.permute.xlu0 %506
        %510 = vset.pattern.permute.xlu0 0
        %511 = vperm.xlu0 %510, %v461
        %v512 = vpop.permute.xlu0 %511
        %515 = vset.pattern.permute.xlu0 0
        %516 = vperm.xlu0 %515, %v462
        %v517 = vpop.permute.xlu0 %516
        %v519 = vmul.f32 %v463, %v502
        %v520 = vmul.f32 %v464, %v507
        %v521 = vmul.f32 %v465, %v512
        %v522 = vmul.f32 %v466, %v517
        %v523 = vmul.f32 %v467, %v502
        %v524 = vmul.f32 %v468, %v507
        %v525 = vmul.f32 %v469, %v512
        %v526 = vmul.f32 %v470, %v517
        %v527 = vmul.f32 %v471, %v502
        %v528 = vmul.f32 %v472, %v507
        %v529 = vmul.f32 %v473, %v512
        %v530 = vmul.f32 %v474, %v517
        %v531 = vmul.f32 %v475, %v502
        %v532 = vmul.f32 %v476, %v507
        %v533 = vmul.f32 %v477, %v512
        %v534 = vmul.f32 %v478, %v517
        %v535 = vmul.f32 %v479, %v502
        %v536 = vmul.f32 %v480, %v507
        %v537 = vmul.f32 %v481, %v512
        %v538 = vmul.f32 %v482, %v517
        %v539 = vmul.f32 %v483, %v502
        %v540 = vmul.f32 %v484, %v507
        %v541 = vmul.f32 %v485, %v512
        %v542 = vmul.f32 %v486, %v517
        %v543 = vmul.f32 %v487, %v502
        %v544 = vmul.f32 %v488, %v507
        %v545 = vmul.f32 %v489, %v512
        %v546 = vmul.f32 %v490, %v517
        %v547 = vmul.f32 %v491, %v502
        %v548 = vmul.f32 %v492, %v507
        %v549 = vmul.f32 %v493, %v512
        %v550 = vmul.f32 %v494, %v517
        %v551 = vmul.f32 %v495, %v502
        %v552 = vmul.f32 %v496, %v507
        %v553 = vmul.f32 %v497, %v512
        %v554 = vmul.f32 %v498, %v517
        %v555 = vld [vmem:[%s5] sm:$0xff]
        %v556 = vld [vmem:[%s5 + $0x8] sm:$0xff]
        %v557 = vld [vmem:[%s5 + $0x10] sm:$0xff]
        %v558 = vld [vmem:[%s5 + $0x18] sm:$0xff]
        %v559 = vmul.f32 %v459, %v459
        %v560 = vmul.f32 %v460, %v460
        %v561 = vmul.f32 %v461, %v461
        %v562 = vmul.f32 %v462, %v462
        %564 = vset.pattern.permute.xlu0 0
        %565 = vperm.xlu0 %564, %v559
        %v566 = vpop.permute.xlu0 %565
        %569 = vset.pattern.permute.xlu0 0
        %570 = vperm.xlu0 %569, %v560
        %v571 = vpop.permute.xlu0 %570
        %574 = vset.pattern.permute.xlu0 0
        %575 = vperm.xlu0 %574, %v561
        %v576 = vpop.permute.xlu0 %575
        %579 = vset.pattern.permute.xlu0 0
        %580 = vperm.xlu0 %579, %v562
        %v581 = vpop.permute.xlu0 %580
        %v583 = vmul.f32 %v555, %v566
        %v584 = vmul.f32 %v556, %v571
        %v585 = vmul.f32 %v557, %v576
        %v586 = vmul.f32 %v558, %v581
        %v587 = vsel %vm442, %v583, 0.0
        %v588 = vsel %vm442, %v584, 0.0
        %v589 = vadd.f32 %v587, %v588
        %v590 = vsel %vm442, %v585, 0.0
        %v591 = vadd.f32 %v589, %v590
        %v592 = vsel %vm442, %v586, 0.0
        %v593 = vadd.f32 %v591, %v592
        %v594 = vrot.slane %v593, 4
        %v595 = vadd.f32 %v593, %v594
        %v596 = vrot.slane %v595, 2
        %v597 = vadd.f32 %v595, %v596
        %v598 = vrot.slane %v597, 1
        %v599 = vadd.f32 %v597, %v598
        %v600 = vadd.f32 %v599, 1e-08
        %v601 = vrsqrt.pop %v600
        %v602 = vmul.f32 %v601, %v600
        %v603 = vmul.f32 %v602, %v601
        %v604 = vmul.f32 0.5, %v603
        %v605 = vsub.f32 1.5, %v604
        %v606 = vmul.f32 %v601, %v605
        %vm607 = vweird.f32 %v600
        %vm608 = vweird.f32 %v601
        %vm609 = vmor %vm607, %vm608
        %v610 = vsel %vm609, %v601, %v606
        %v611 = vmul.f32 %v519, %v610
        %v612 = vmul.f32 %v520, %v610
        %v613 = vmul.f32 %v521, %v610
        %v614 = vmul.f32 %v522, %v610
        %v615 = vmul.f32 %v523, %v610
        %v616 = vmul.f32 %v524, %v610
        %v617 = vmul.f32 %v525, %v610
        %v618 = vmul.f32 %v526, %v610
        %v619 = vmul.f32 %v527, %v610
        %v620 = vmul.f32 %v528, %v610
        %v621 = vmul.f32 %v529, %v610
        %v622 = vmul.f32 %v530, %v610
        %v623 = vmul.f32 %v531, %v610
        %v624 = vmul.f32 %v532, %v610
        %v625 = vmul.f32 %v533, %v610
        %v626 = vmul.f32 %v534, %v610
        %v627 = vmul.f32 %v535, %v610
        %v628 = vmul.f32 %v536, %v610
        %v629 = vmul.f32 %v537, %v610
        %v630 = vmul.f32 %v538, %v610
        %v631 = vmul.f32 %v539, %v610
        %v632 = vmul.f32 %v540, %v610
        %v633 = vmul.f32 %v541, %v610
        %v634 = vmul.f32 %v542, %v610
        %v635 = vmul.f32 %v543, %v610
        %v636 = vmul.f32 %v544, %v610
        %v637 = vmul.f32 %v545, %v610
        %v638 = vmul.f32 %v546, %v610
        %v639 = vmul.f32 %v547, %v610
        %v640 = vmul.f32 %v548, %v610
        %v641 = vmul.f32 %v549, %v610
        %v642 = vmul.f32 %v550, %v610
        %v643 = vmul.f32 %v551, %v610
        %v644 = vmul.f32 %v552, %v610
        %v645 = vmul.f32 %v553, %v610
        %v646 = vmul.f32 %v554, %v610
        %v647 = vpack.c.bf16 %v611, %v611
        %v648 = vpack.c.bf16 %v612, %v612
        %v649 = vpack.c.bf16 %v613, %v613
        %v650 = vpack.c.bf16 %v614, %v614
        %v651 = vpack.c.bf16 %v615, %v615
        %v652 = vpack.c.bf16 %v616, %v616
        %v653 = vpack.c.bf16 %v617, %v617
        %v654 = vpack.c.bf16 %v618, %v618
        %v655 = vpack.c.bf16 %v619, %v619
        %v656 = vpack.c.bf16 %v620, %v620
        %v657 = vpack.c.bf16 %v621, %v621
        %v658 = vpack.c.bf16 %v622, %v622
        %v659 = vpack.c.bf16 %v623, %v623
        %v660 = vpack.c.bf16 %v624, %v624
        %v661 = vpack.c.bf16 %v625, %v625
        %v662 = vpack.c.bf16 %v626, %v626
        %v663 = vpack.c.bf16 %v627, %v627
        %v664 = vpack.c.bf16 %v628, %v628
        %v665 = vpack.c.bf16 %v629, %v629
        %v666 = vpack.c.bf16 %v630, %v630
        %v667 = vpack.c.bf16 %v631, %v631
        %v668 = vpack.c.bf16 %v632, %v632
        %v669 = vpack.c.bf16 %v633, %v633
        %v670 = vpack.c.bf16 %v634, %v634
        %v671 = vpack.c.bf16 %v635, %v635
        %v672 = vpack.c.bf16 %v636, %v636
        %v673 = vpack.c.bf16 %v637, %v637
        %v674 = vpack.c.bf16 %v638, %v638
        %v675 = vpack.c.bf16 %v639, %v639
        %v676 = vpack.c.bf16 %v640, %v640
        %v677 = vpack.c.bf16 %v641, %v641
        %v678 = vpack.c.bf16 %v642, %v642
        %v679 = vpack.c.bf16 %v643, %v643
        %v680 = vpack.c.bf16 %v644, %v644
        %v681 = vpack.c.bf16 %v645, %v645
        %v682 = vpack.c.bf16 %v646, %v646
        %v683 = vld [vmem:[%s417] sm:$0xff]
        %v684 = vld [vmem:[%s417 + $0x8] sm:$0xff]
        %v685 = vld [vmem:[%s417 + $0x10] sm:$0xff]
        %v686 = vpack.c.bf16 %v684, %v683
        %v687 = vpack.c.bf16 %v685, %v685
        %v688 = vld [vmem:[%s417 + $0x1] sm:$0xff]
        %v689 = vld [vmem:[%s417 + $0x9] sm:$0xff]
        %v690 = vld [vmem:[%s417 + $0x11] sm:$0xff]
        %v691 = vpack.c.bf16 %v689, %v688
        %v692 = vpack.c.bf16 %v690, %v690
        %v697 = vunpack.c.l.b16 %v651
        %v698 = vunpack.c.l.b16 %v652
        %v699 = vunpack.c.l.b16 %v653
        %v700 = vunpack.c.l.b16 %v654
        %v701 = vpack.c.b16 %v698, %v697
        %v702 = vpack.c.b16 %v700, %v699
        %v706 = vsel %vm442, %v691, 0
        %v709 = vsel %vm442, %v692, 0
        %711 = vmatpush.bf16.msra.mxu0 0
        %712 = vmatpush.bf16.msra.mxu0 0
        %713 = vmatpush.bf16.msra.mxu0 0
        %714 = vmatpush.bf16.msra.mxu0 0
        %715 = vmatpush.bf16.msra.mxu0 0
        %716 = vmatpush.bf16.msra.mxu0 0
        %717 = vmatpush.bf16.msra.mxu0 %v702
        %718 = vmatpush.bf16.msra.mxu0 %v701
        %719 = vmatmul.bf16.gmra.mxu0 %v706
        %v720 = vpop.f32.mrf.mxu0
        %v721 = vadd.f32 0.0, %v720
        %v722 = vpop.f32.mrf.mxu0
        %v723 = vadd.f32 0.0, %v722
        %724 = vmatmul.bf16.gmra.mxu0 %v709
        %v725 = vpop.f32.mrf.mxu0
        %v726 = vadd.f32 0.0, %v725
        %v727 = vpop.f32.mrf.mxu0
        %728 = vdwg.mxu0
        %v733 = vunpack.c.l.b16 %v647
        %v734 = vunpack.c.l.b16 %v648
        %v735 = vunpack.c.l.b16 %v649
        %v736 = vunpack.c.l.b16 %v650
        %v737 = vpack.c.b16 %v734, %v733
        %v738 = vpack.c.b16 %v736, %v735
        %v742 = vsel %vm442, %v686, 0
        %v745 = vsel %vm442, %v687, 0
        %747 = vmatpush.bf16.msra.mxu0 0
        %748 = vmatpush.bf16.msra.mxu0 0
        %749 = vmatpush.bf16.msra.mxu0 0
        %750 = vmatpush.bf16.msra.mxu0 0
        %751 = vmatpush.bf16.msra.mxu0 0
        %752 = vmatpush.bf16.msra.mxu0 0
        %753 = vmatpush.bf16.msra.mxu0 %v738
        %754 = vmatpush.bf16.msra.mxu0 %v737
        %755 = vmatmul.bf16.gmra.mxu0 %v742
        %v756 = vpop.f32.mrf.mxu0
        %v757 = vadd.f32 %v721, %v756
        %v758 = vpop.f32.mrf.mxu0
        %v759 = vadd.f32 %v723, %v758
        %760 = vmatmul.bf16.gmra.mxu0 %v745
        %v761 = vpop.f32.mrf.mxu0
        %v762 = vadd.f32 %v726, %v761
        %v763 = vpop.f32.mrf.mxu0
        %764 = vdwg.mxu0
        %v765 = vld [vmem:[%s417 + $0x2] sm:$0xff]
        %v766 = vld [vmem:[%s417 + $0xa] sm:$0xff]
        %v767 = vld [vmem:[%s417 + $0x12] sm:$0xff]
        %v768 = vpack.c.bf16 %v766, %v765
        %v769 = vpack.c.bf16 %v767, %v767
        %v774 = vunpack.c.l.b16 %v655
        %v775 = vunpack.c.l.b16 %v656
        %v776 = vunpack.c.l.b16 %v657
        %v777 = vunpack.c.l.b16 %v658
        %v778 = vpack.c.b16 %v775, %v774
        %v779 = vpack.c.b16 %v777, %v776
        %v783 = vsel %vm442, %v768, 0
        %v786 = vsel %vm442, %v769, 0
        %788 = vmatpush.bf16.msra.mxu0 0
        %789 = vmatpush.bf16.msra.mxu0 0
        %790 = vmatpush.bf16.msra.mxu0 0
        %791 = vmatpush.bf16.msra.mxu0 0
        %792 = vmatpush.bf16.msra.mxu0 0
        %793 = vmatpush.bf16.msra.mxu0 0
        %794 = vmatpush.bf16.msra.mxu0 %v779
        %795 = vmatpush.bf16.msra.mxu0 %v778
        %796 = vmatmul.bf16.gmra.mxu0 %v783
        %v797 = vpop.f32.mrf.mxu0
        %v798 = vadd.f32 0.0, %v797
        %v799 = vpop.f32.mrf.mxu0
        %v800 = vadd.f32 0.0, %v799
        %801 = vmatmul.bf16.gmra.mxu0 %v786
        %v802 = vpop.f32.mrf.mxu0
        %v803 = vadd.f32 0.0, %v802
        %v804 = vpop.f32.mrf.mxu0
        %805 = vdwg.mxu0
        %v806 = vadd.f32 %v757, %v798
        %v807 = vadd.f32 %v759, %v800
        %v808 = vadd.f32 %v762, %v803
        %v809 = vld [vmem:[%s417 + $0x6] sm:$0xff]
        %v810 = vld [vmem:[%s417 + $0xe] sm:$0xff]
        %v811 = vld [vmem:[%s417 + $0x16] sm:$0xff]
        %v812 = vpack.c.bf16 %v810, %v809
        %v813 = vpack.c.bf16 %v811, %v811
        %v818 = vunpack.c.l.b16 %v659
        %v819 = vunpack.c.l.b16 %v660
        %v820 = vunpack.c.l.b16 %v661
        %v821 = vunpack.c.l.b16 %v662
        %v822 = vpack.c.b16 %v819, %v818
        %v823 = vpack.c.b16 %v821, %v820
        %v827 = vsel %vm442, %v812, 0
        %v830 = vsel %vm442, %v813, 0
        %832 = vmatpush.bf16.msra.mxu0 0
        %833 = vmatpush.bf16.msra.mxu0 0
        %834 = vmatpush.bf16.msra.mxu0 0
        %835 = vmatpush.bf16.msra.mxu0 0
        %836 = vmatpush.bf16.msra.mxu0 0
        %837 = vmatpush.bf16.msra.mxu0 0
        %838 = vmatpush.bf16.msra.mxu0 %v823
        %839 = vmatpush.bf16.msra.mxu0 %v822
        %840 = vmatmul.bf16.gmra.mxu0 %v827
        %v841 = vpop.f32.mrf.mxu0
        %v842 = vadd.f32 0.0, %v841
        %v843 = vpop.f32.mrf.mxu0
        %v844 = vadd.f32 0.0, %v843
        %845 = vmatmul.bf16.gmra.mxu0 %v830
        %v846 = vpop.f32.mrf.mxu0
        %v847 = vadd.f32 0.0, %v846
        %v848 = vpop.f32.mrf.mxu0
        %849 = vdwg.mxu0
        %v850 = vadd.f32 %v806, %v842
        %v851 = vadd.f32 %v807, %v844
        %v852 = vadd.f32 %v808, %v847
        %v853 = vld [vmem:[%s417 + $0x7] sm:$0xff]
        %v854 = vld [vmem:[%s417 + $0xf] sm:$0xff]
        %v855 = vld [vmem:[%s417 + $0x17] sm:$0xff]
        %v856 = vpack.c.bf16 %v854, %v853
        %v857 = vpack.c.bf16 %v855, %v855
        %v862 = vunpack.c.l.b16 %v663
        %v863 = vunpack.c.l.b16 %v664
        %v864 = vunpack.c.l.b16 %v665
        %v865 = vunpack.c.l.b16 %v666
        %v866 = vpack.c.b16 %v863, %v862
        %v867 = vpack.c.b16 %v865, %v864
        %v871 = vsel %vm442, %v856, 0
        %v874 = vsel %vm442, %v857, 0
        %876 = vmatpush.bf16.msra.mxu0 0
        %877 = vmatpush.bf16.msra.mxu0 0
        %878 = vmatpush.bf16.msra.mxu0 0
        %879 = vmatpush.bf16.msra.mxu0 0
        %880 = vmatpush.bf16.msra.mxu0 0
        %881 = vmatpush.bf16.msra.mxu0 0
        %882 = vmatpush.bf16.msra.mxu0 %v867
        %883 = vmatpush.bf16.msra.mxu0 %v866
        %884 = vmatmul.bf16.gmra.mxu0 %v871
        %v885 = vpop.f32.mrf.mxu0
        %v886 = vadd.f32 0.0, %v885
        %v887 = vpop.f32.mrf.mxu0
        %v888 = vadd.f32 0.0, %v887
        %889 = vmatmul.bf16.gmra.mxu0 %v874
        %v890 = vpop.f32.mrf.mxu0
        %v891 = vadd.f32 0.0, %v890
        %v892 = vpop.f32.mrf.mxu0
        %893 = vdwg.mxu0
        %v894 = vadd.f32 %v850, %v886
        %v895 = vadd.f32 %v851, %v888
        %v896 = vadd.f32 %v852, %v891
        %v897 = vld [vmem:[%s417 + $0x8] sm:$0xff]
        %v898 = vld [vmem:[%s417 + $0x10] sm:$0xff]
        %v899 = vld [vmem:[%s417 + $0x18] sm:$0xff]
        %v900 = vpack.c.bf16 %v898, %v897
        %v901 = vpack.c.bf16 %v899, %v899
        %v906 = vunpack.c.l.b16 %v667
        %v907 = vunpack.c.l.b16 %v668
        %v908 = vunpack.c.l.b16 %v669
        %v909 = vunpack.c.l.b16 %v670
        %v910 = vpack.c.b16 %v907, %v906
        %v911 = vpack.c.b16 %v909, %v908
        %v915 = vsel %vm442, %v900, 0
        %v918 = vsel %vm442, %v901, 0
        %920 = vmatpush.bf16.msra.mxu0 0
        %921 = vmatpush.bf16.msra.mxu0 0
        %922 = vmatpush.bf16.msra.mxu0 0
        %923 = vmatpush.bf16.msra.mxu0 0
        %924 = vmatpush.bf16.msra.mxu0 0
        %925 = vmatpush.bf16.msra.mxu0 0
        %926 = vmatpush.bf16.msra.mxu0 %v911
        %927 = vmatpush.bf16.msra.mxu0 %v910
        %928 = vmatmul.bf16.gmra.mxu0 %v915
        %v929 = vpop.f32.mrf.mxu0
        %v930 = vadd.f32 0.0, %v929
        %v931 = vpop.f32.mrf.mxu0
        %v932 = vadd.f32 0.0, %v931
        %933 = vmatmul.bf16.gmra.mxu0 %v918
        %v934 = vpop.f32.mrf.mxu0
        %v935 = vadd.f32 0.0, %v934
        %v936 = vpop.f32.mrf.mxu0
        %937 = vdwg.mxu0
        %v938 = vadd.f32 %v894, %v930
        %v939 = vadd.f32 %v895, %v932
        %v940 = vadd.f32 %v896, %v935
        %v941 = vld [vmem:[%s417 + $0xc] sm:$0xff]
        %v942 = vld [vmem:[%s417 + $0x14] sm:$0xff]
        %v943 = vld [vmem:[%s417 + $0x1c] sm:$0xff]
        %v944 = vpack.c.bf16 %v942, %v941
        %v945 = vpack.c.bf16 %v943, %v943
        %v950 = vunpack.c.l.b16 %v671
        %v951 = vunpack.c.l.b16 %v672
        %v952 = vunpack.c.l.b16 %v673
        %v953 = vunpack.c.l.b16 %v674
        %v954 = vpack.c.b16 %v951, %v950
        %v955 = vpack.c.b16 %v953, %v952
        %v959 = vsel %vm442, %v944, 0
        %v962 = vsel %vm442, %v945, 0
        %964 = vmatpush.bf16.msra.mxu0 0
        %965 = vmatpush.bf16.msra.mxu0 0
        %966 = vmatpush.bf16.msra.mxu0 0
        %967 = vmatpush.bf16.msra.mxu0 0
        %968 = vmatpush.bf16.msra.mxu0 0
        %969 = vmatpush.bf16.msra.mxu0 0
        %970 = vmatpush.bf16.msra.mxu0 %v955
        %971 = vmatpush.bf16.msra.mxu0 %v954
        %972 = vmatmul.bf16.gmra.mxu0 %v959
        %v973 = vpop.f32.mrf.mxu0
        %v974 = vadd.f32 0.0, %v973
        %v975 = vpop.f32.mrf.mxu0
        %v976 = vadd.f32 0.0, %v975
        %977 = vmatmul.bf16.gmra.mxu0 %v962
        %v978 = vpop.f32.mrf.mxu0
        %v979 = vadd.f32 0.0, %v978
        %v980 = vpop.f32.mrf.mxu0
        %981 = vdwg.mxu0
        %v982 = vadd.f32 %v938, %v974
        %v983 = vadd.f32 %v939, %v976
        %v984 = vadd.f32 %v940, %v979
        %v985 = vld [vmem:[%s417 + $0xd] sm:$0xff]
        %v986 = vld [vmem:[%s417 + $0x15] sm:$0xff]
        %v987 = vld [vmem:[%s417 + $0x1d] sm:$0xff]
        %v988 = vpack.c.bf16 %v986, %v985
        %v989 = vpack.c.bf16 %v987, %v987
        %v994 = vunpack.c.l.b16 %v675
        %v995 = vunpack.c.l.b16 %v676
        %v996 = vunpack.c.l.b16 %v677
        %v997 = vunpack.c.l.b16 %v678
        %v998 = vpack.c.b16 %v995, %v994
        %v999 = vpack.c.b16 %v997, %v996
        %v1003 = vsel %vm442, %v988, 0
        %v1006 = vsel %vm442, %v989, 0
        %1008 = vmatpush.bf16.msra.mxu0 0
        %1009 = vmatpush.bf16.msra.mxu0 0
        %1010 = vmatpush.bf16.msra.mxu0 0
        %1011 = vmatpush.bf16.msra.mxu0 0
        %1012 = vmatpush.bf16.msra.mxu0 0
        %1013 = vmatpush.bf16.msra.mxu0 0
        %1014 = vmatpush.bf16.msra.mxu0 %v999
        %1015 = vmatpush.bf16.msra.mxu0 %v998
        %1016 = vmatmul.bf16.gmra.mxu0 %v1003
        %v1017 = vpop.f32.mrf.mxu0
        %v1018 = vadd.f32 0.0, %v1017
        %v1019 = vpop.f32.mrf.mxu0
        %v1020 = vadd.f32 0.0, %v1019
        %1021 = vmatmul.bf16.gmra.mxu0 %v1006
        %v1022 = vpop.f32.mrf.mxu0
        %v1023 = vadd.f32 0.0, %v1022
        %v1024 = vpop.f32.mrf.mxu0
        %1025 = vdwg.mxu0
        %v1026 = vadd.f32 %v982, %v1018
        %v1027 = vadd.f32 %v983, %v1020
        %v1028 = vadd.f32 %v984, %v1023
        %v1029 = vld [vmem:[%s417 + $0xe] sm:$0xff]
        %v1030 = vld [vmem:[%s417 + $0x16] sm:$0xff]
        %v1031 = vld [vmem:[%s417 + $0x1e] sm:$0xff]
        %v1032 = vpack.c.bf16 %v1030, %v1029
        %v1033 = vpack.c.bf16 %v1031, %v1031
        %v1038 = vunpack.c.l.b16 %v679
        %v1039 = vunpack.c.l.b16 %v680
        %v1040 = vunpack.c.l.b16 %v681
        %v1041 = vunpack.c.l.b16 %v682
        %v1042 = vpack.c.b16 %v1039, %v1038
        %v1043 = vpack.c.b16 %v1041, %v1040
        %v1047 = vsel %vm442, %v1032, 0
        %v1050 = vsel %vm442, %v1033, 0
        %1052 = vmatpush.bf16.msra.mxu0 0
        %1053 = vmatpush.bf16.msra.mxu0 0
        %1054 = vmatpush.bf16.msra.mxu0 0
        %1055 = vmatpush.bf16.msra.mxu0 0
        %1056 = vmatpush.bf16.msra.mxu0 0
        %1057 = vmatpush.bf16.msra.mxu0 0
        %1058 = vmatpush.bf16.msra.mxu0 %v1043
        %1059 = vmatpush.bf16.msra.mxu0 %v1042
        %1060 = vmatmul.bf16.gmra.mxu0 %v1047
        %v1061 = vpop.f32.mrf.mxu0
        %v1062 = vadd.f32 0.0, %v1061
        %v1063 = vpop.f32.mrf.mxu0
        %v1064 = vadd.f32 0.0, %v1063
        %1065 = vmatmul.bf16.gmra.mxu0 %v1050
        %v1066 = vpop.f32.mrf.mxu0
        %v1067 = vadd.f32 0.0, %v1066
        %v1068 = vpop.f32.mrf.mxu0
        %1069 = vdwg.mxu0
        %v1070 = vadd.f32 %v1026, %v1062
        %v1071 = vadd.f32 %v1027, %v1064
        %v1072 = vadd.f32 %v1028, %v1067
        %v1073 = vld [vmem:[#allocation2] sm:$0x1]
        %v1074 = vld [vmem:[%s426] sm:$0xff]
        %v1075 = vld [vmem:[%s426 + $0x8] sm:$0xff]
        %v1076 = vld [vmem:[%s426 + $0x10] sm:$0xff]
        %v1078 = vperm.slane %v1073, 0
        %v1080 = vmul.f32 %v1078, %v1074
        %v1081 = vmul.f32 %v1078, %v1075
        %v1082 = vmul.f32 %v1078, %v1076
        %1084 = vset.pattern.permute.xlu0 0
        %1085 = vperm.xlu0 %1084, %v1080
        %v1086 = vpop.permute.xlu0 %1085
        %1089 = vset.pattern.permute.xlu0 0
        %1090 = vperm.xlu0 %1089, %v1081
        %v1091 = vpop.permute.xlu0 %1090
        %1094 = vset.pattern.permute.xlu0 0
        %1095 = vperm.xlu0 %1094, %v1082
        %v1096 = vpop.permute.xlu0 %1095
        %v1098 = vadd.f32 %v1070, %v1086
        %v1099 = vadd.f32 %v1071, %v1091
        %v1100 = vadd.f32 %v1072, %v1096
        %v1101 = vld [vmem:[%s8] sm:$0x1]
        %v1103 = vperm.slane %v1101, 0
        %v1105 = vadd.f32 %v1098, %v1103
        %v1106 = vadd.f32 %v1099, %v1103
        %v1107 = vadd.f32 %v1100, %v1103
        %vm1108 = vcmp.ge.f32.partialorder %v1105, 0.0
        %vm1109 = vcmp.ge.f32.partialorder %v1106, 0.0
        %vm1110 = vcmp.ge.f32.partialorder %v1107, 0.0
        %v1111 = vmul.f32 %v1105, 0.2
        %v1112 = vmul.f32 %v1106, 0.2
        %v1113 = vmul.f32 %v1107, 0.2
        %v1114 = vsel %vm1108, %v1105, %v1111
        %v1115 = vsel %vm1109, %v1106, %v1112
        %v1116 = vsel %vm1110, %v1107, %v1113
        %1117 = vst.msk [vmem:[%s405] sm:$0xff] %vm442, %v1114
        %1118 = vst.msk [vmem:[%s405 + $0x8] sm:$0xff] %vm442, %v1115
        %1119 = vst.msk [vmem:[%s405 + $0x10] sm:$0xff] %vm442, %v1116
        %s1120 = sand.u32 %s256, 1
        %s1121 = scalar_lea.sflag [#allocation5], %s1120
        %s1122 = sand.u32 %s256, 1
        %s1123 = smul.addr %s1122, 24
        %s1124 = scalar_lea.vmem [#allocation6], %s1123
        // Predicated region
        $region61: #{tpu_custom_call.1} parent=55 // pred_check
          %p1125 = pneg %p266
        $region62: #{tpu_custom_call.1} parent=55 // pred_check_branch
          %1127 = sbr.rel (%p1125) target = $region64
        $region63: #{tpu_custom_call.1} parent=55 // pred_region
          %s1128 = smul.u32 3, %s31
          %1130 = vsyncadd %s1121, 0
          %s1131 = smul.addr %s30, 3
          %s1132 = sadd.s32 %s1128, %s1131
          %s1133 = smul.addr %s1132, 8
          %s1134 = scalar_lea.hbm %s9, %s1133
          %s1135 = sshll.u32 %s1124, 4
          %s1136 = int_to_ptr.vmem [resolvable:$true] %s1135
          %s1137 = sshll.u32 %s1134, 4
          %s1138 = int_to_ptr.hbm [resolvable:$true] %s1137
          %1143 = dma.vmem_to_hbm [thread:$0]  %s1136, 384, %s1138, %s1121, 128, 128, 8
        $region64: #{tpu_custom_call.1} parent=55 // pred_fallthru
          _
      $region56: #{tpu_custom_call.1} parent=5 // pred_fallthru
        _
      %p1144 = scmp.le.s32.totalorder 2, %s21
      // Predicated region
      $region65: #{tpu_custom_call.1} parent=5 // pred_check
        %p1145 = pneg %p1144
      $region66: #{tpu_custom_call.1} parent=5 // pred_check_branch
        %1147 = sbr.rel (%p1145) target = $region68
      $region67: #{tpu_custom_call.1} parent=5 // pred_region
        %s1148 = ssub.s32 %s21, 2
        // Predicated region
        $region69: #{tpu_custom_call.1} parent=67 // pred_check
          %p1149 = pneg %p272
        $region70: #{tpu_custom_call.1} parent=67 // pred_check_branch
          %1151 = sbr.rel (%p1149) target = $region72
        $region71: #{tpu_custom_call.1} parent=67 // pred_region
          %s1152 = sand.u32 %s257, 1
          %s1153 = scalar_lea.sflag [#allocation5], %s1152
          %s1154 = sand.u32 %s257, 1
          %s1155 = smul.addr %s1154, 24
          %s1156 = scalar_lea.vmem [#allocation6], %s1155
          %1158 = dma.done %s1153, 384
        $region72: #{tpu_custom_call.1} parent=67 // pred_fallthru
          _
      $region68: #{tpu_custom_call.1} parent=5 // pred_fallthru
        _
    $region6: #{tpu_custom_call.1} parent=1 // loop_footer
      %s25 = sadd.s32 1, %s21
    $region7: #{tpu_custom_call.1} parent=1 // loop_footer_branch
      %20 = sbr.rel target = $region3
    $region8: #{tpu_custom_call.1} parent=1 // loop_exit
      _
    %1159 = vsyncpa [#allocation4], 1
    %s1160 = scalar_lea.sflag [#allocation4], 1
    %1161 = vsyncpa %s1160, 1
    %1162 = vsyncpa [#allocation5], 1
    %s1163 = scalar_lea.sflag [#allocation5], 1
    %1164 = vsyncpa %s1163, 1

</llo_original>
